<compile_context>
chip_gen: v7x
topology: tpu7x:2x2x1
jax: 0.10.0
libtpu: 0.0.40
codegen_flags: <defaults>
</compile_context>

<pallas_src>
import functools

import jax
import jax.numpy as jnp
from jax.experimental import pallas as pl
from jax.experimental.pallas import tpu as pltpu


# --------------------------------------------------------------------------- #
# Kernel
# --------------------------------------------------------------------------- #
def _patch_merging_kernel(xe_ref, xo_ref, we_ref, wo_ref, g_ref, b_ref, o_ref,
                          *, eps):
    # xe_ref / xo_ref: (rb, W/2, 2C)  even-H / odd-H rows of the 2x2 blocks;
    #                  channel layout [w-even | w-odd] -> [x0|x2] / [x1|x3]
    # we_ref / wo_ref: (2C, 2C)       permuted halves of the reduction weight
    # g_ref / b_ref:   (1, 2C)        LayerNorm gamma / beta (f32)
    # o_ref:           (rb*W/2, 2C)   merged + reduced + normalized tokens
    rb, w2, c2 = xe_ref.shape
    tok = rb * w2
    xe = xe_ref[...].reshape(tok, c2)   # layout no-op when w2 % 8 == 0
    xo = xo_ref[...].reshape(tok, c2)

    # cat(x0,x1,x2,x3) @ W_red  ==  [x0|x2] @ We + [x1|x3] @ Wo   (f32 accumulation)
    y = jnp.dot(xe, we_ref[...], preferred_element_type=jnp.float32)
    y = y + jnp.dot(xo, wo_ref[...], preferred_element_type=jnp.float32)

    # LayerNorm over the lane-dense 2C axis; one-pass stats in f32.
    inv_c = 1.0 / c2
    s1 = jnp.sum(y, axis=-1, keepdims=True)
    s2 = jnp.sum(y * y, axis=-1, keepdims=True)
    mean = s1 * inv_c
    var = jnp.maximum(s2 * inv_c - mean * mean, 0.0)
    yn = (y - mean) * jax.lax.rsqrt(var + eps)
    o_ref[...] = (yn * g_ref[...] + b_ref[...]).astype(o_ref.dtype)


# --------------------------------------------------------------------------- #
# Tiling / VMEM accounting
# --------------------------------------------------------------------------- #
def _ceil_to(x, m):
    return -(-x // m) * m


def _vmem_capacity_bytes():
    try:
        info = pltpu.get_tpu_info()
        cap = getattr(info, "vmem_capacity_bytes", None)
        if cap:
            return int(cap)
    except Exception:
        pass
    return 64 * 1024 * 1024   # conservative (v7x-sized) fallback


def _block_vmem_bytes(rb, W2, C2, in_item, w_item, out_item):
    """Conservative VMEM footprint of one grid step (padded VMEM layouts)."""
    pw2 = _ceil_to(W2, 8)
    pc2 = _ceil_to(C2, 128)
    tok = rb * W2
    ptok = _ceil_to(max(tok, 1), 8)
    in_blk = rb * pw2 * pc2 * in_item          # one (rb, W2, C2) input block
    out_blk = ptok * pc2 * out_item            # (tok, C2) output block
    w_blk = pc2 * pc2 * w_item                 # one (C2, C2) weight
    affine = 2 * 8 * pc2 * 4                   # gamma / beta
    f32_tmp = 3 * ptok * pc2 * 4               # y + relayout copies + yn
    return (2 * 2 * in_blk                     # xe, xo double-buffered
            + 2 * out_blk                      # output double-buffered
            + 2 * 2 * w_blk                    # We, Wo (assume double-buffered)
            + affine + f32_tmp)


def _pick_row_tile(R, W2, C2, *, in_item, w_item, out_item,
                   target_tokens, vmem_budget, min_steps):
    """Largest rb dividing R s.t. blocks fit the budget, the (tok, C2) output
    block is sublane-aligned, and the grid keeps >= min_steps steps."""
    def need(rb):
        return _block_vmem_bytes(rb, W2, C2, in_item, w_item, out_item)

    divs = [d for d in range(1, R + 1) if R % d == 0]
    # (8,128) rule: output block needs tok % 8 == 0 unless it spans the whole output.
    layout_ok = [d for d in divs if (d * W2) % 8 == 0 or d == R]
    min_steps_eff = max(1, min(min_steps, R))
    cands = [d for d in layout_ok
             if R // d >= min_steps_eff
             and d * W2 <= target_tokens
             and need(d) <= vmem_budget]
    if cands:
        rb = max(cands)
    else:
        cands = [d for d in layout_ok if need(d) <= vmem_budget]
        rb = min(cands) if cands else min(layout_ok)
    return rb, need(rb)


# --------------------------------------------------------------------------- #
# Parameter preprocessing (hoisted out of the forward pass)
# --------------------------------------------------------------------------- #
def prepare_patch_merging_params(w_red, gamma, beta, *, param_dtype=jnp.bfloat16):
    """One-time preprocessing.  w_red: (4C, 2C) == torch `reduction.weight.T`.

    Folds the 2x2-concat permutation into the weight halves so that
    cat(x0,x1,x2,x3) @ w_red == [x0|x2] @ we + [x1|x3] @ wo.
    """
    C4, C2 = w_red.shape
    assert C4 == 2 * C2, "w_red must be (4C, 2C)"
    C = C4 // 4
    we = jnp.concatenate([w_red[0:C], w_red[2 * C:3 * C]], axis=0).astype(param_dtype)
    wo = jnp.concatenate([w_red[C:2 * C], w_red[3 * C:4 * C]], axis=0).astype(param_dtype)
    gamma2 = gamma.reshape(1, C2).astype(jnp.float32)
    beta2 = beta.reshape(1, C2).astype(jnp.float32)
    return we, wo, gamma2, beta2


# --------------------------------------------------------------------------- #
# Forward wrapper
# --------------------------------------------------------------------------- #
def patch_merging(x, we, wo, gamma2, beta2, *, input_resolution, eps=1e-5,
                  out_dtype=None):
    """Fused PatchMerging forward.

    x: (B, H*W, C) (bf16 recommended).  we/wo: (2C, 2C).  gamma2/beta2: (1, 2C).
    Returns (B, H/2*W/2, 2C) in `out_dtype` (default: x.dtype).
    """
    B, L, C = x.shape
    H, W = input_resolution
    assert L == H * W, "input feature has wrong size"
    assert H % 2 == 0 and W % 2 == 0, f"x size ({H}*{W}) are not even."
    H2, W2 = H // 2, W // 2
    C2 = 2 * C
    assert we.shape == (C2, C2) and wo.shape == (C2, C2)
    assert gamma2.shape == (1, C2) and beta2.shape == (1, C2)
    if out_dtype is None:
        out_dtype = x.dtype

    R = B * H2                          # merged-row groups
    n_out = R * W2                      # total merged tokens
    x4 = x.reshape(R, 2, W2, C2)        # free row-major reshape

    vmem_cap = _vmem_capacity_bytes()
    target_tokens = 8192 if vmem_cap >= (96 << 20) else 2048
    rb, need = _pick_row_tile(
        R, W2, C2,
        in_item=jnp.dtype(x.dtype).itemsize,
        w_item=jnp.dtype(we.dtype).itemsize,
        out_item=jnp.dtype(out_dtype).itemsize,
        target_tokens=target_tokens,
        vmem_budget=vmem_cap // 2,
        min_steps=8)
    tok = rb * W2

    vmem_limit = min(int(0.75 * vmem_cap),
                     max(32 << 20, need + max(need // 2, 8 << 20)))
    vmem_limit = max(vmem_limit, min(vmem_cap, need + (4 << 20)))

    def call(single_buffer_params):
        pmode = {"pipeline_mode": pl.Buffered(1)} if single_buffer_params else {}
        grid_spec = pltpu.PrefetchScalarGridSpec(
            num_scalar_prefetch=0,
            grid=(R // rb,),
            in_specs=[
                # even-H plane of the 2x2 blocks: channels [x0 | x2]
                pl.BlockSpec((rb, None, W2, C2), lambda i: (i, 0, 0, 0)),
                # odd-H plane: channels [x1 | x3]
                pl.BlockSpec((rb, None, W2, C2), lambda i: (i, 1, 0, 0)),
                pl.BlockSpec((C2, C2), lambda i: (0, 0), **pmode),   # We
                pl.BlockSpec((C2, C2), lambda i: (0, 0), **pmode),   # Wo
                pl.BlockSpec((1, C2), lambda i: (0, 0), **pmode),    # gamma
                pl.BlockSpec((1, C2), lambda i: (0, 0), **pmode),    # beta
            ],
            out_specs=pl.BlockSpec((tok, C2), lambda i: (i, 0)),
        )
        return pl.pallas_call(
            functools.partial(_patch_merging_kernel, eps=eps),
            out_shape=jax.ShapeDtypeStruct((n_out, C2), out_dtype),
            grid_spec=grid_spec,
            compiler_params=pltpu.CompilerParams(
                dimension_semantics=("parallel",),
                vmem_limit_bytes=int(vmem_limit)),
        )(x4, x4, we, wo, gamma2, beta2)

    try:
        y = call(True)
    except Exception:
        # pipeline_mode / Buffered(1) not honoured on this JAX build: fall back to
        # default double buffering (VMEM accounting already assumed it).
        y = call(False)

    return y.reshape(B, H2 * W2, C2)    # free reshape, no transpose


# --------------------------------------------------------------------------- #
# Pure-JAX reference (mirrors the PyTorch module)
# --------------------------------------------------------------------------- #
def _reference(x, w_red, gamma, beta, *, input_resolution, eps=1e-5):
    B, L, C = x.shape
    H, W = input_resolution
    xr = x.reshape(B, H, W, C)
    x0 = xr[:, 0::2, 0::2, :]
    x1 = xr[:, 1::2, 0::2, :]
    x2 = xr[:, 0::2, 1::2, :]
    x3 = xr[:, 1::2, 1::2, :]
    xc = jnp.concatenate([x0, x1, x2, x3], axis=-1).reshape(B, -1, 4 * C)
    y = jnp.einsum("blc,cd->bld", xc, w_red)
    mean = jnp.mean(y, axis=-1, keepdims=True)
    var = jnp.mean(jnp.square(y - mean), axis=-1, keepdims=True)
    return (y - mean) / jnp.sqrt(var + eps) * gamma + beta


if __name__ == "__main__":
    # Small module-consistent shapes: B=2, H=W=16 (L=256), dim=64
    #   -> 64 merged tokens per image, 2*dim = 128 channels (lane-dense),
    #      W/2 = 8 so the in-kernel token flatten is layout-free.
    B, H, W, dim = 2, 16, 16, 64
    C2 = 2 * dim

    key = jax.random.PRNGKey(0)
    kx, kw, kg, kb = jax.random.split(key, 4)
    x = jax.random.normal(kx, (B, H * W, dim), dtype=jnp.float32)
    # torch nn.Linear(4*dim, 2*dim) stores weight as (2*dim, 4*dim); we take its
    # transpose (4*dim, 2*dim).
    w_red = jax.random.normal(kw, (4 * dim, C2), dtype=jnp.float32) * 0.05
    gamma = 1.0 + 0.1 * jax.random.normal(kg, (C2,), dtype=jnp.float32)
    beta = 0.1 * jax.random.normal(kb, (C2,), dtype=jnp.float32)

    # 1) Exact-semantics check: f32 streams, compare to the torch-equivalent math.
    params32 = prepare_patch_merging_params(w_red, gamma, beta,
                                            param_dtype=jnp.float32)
    out32 = patch_merging(x, *params32, input_resolution=(H, W))
    out32 = jax.block_until_ready(out32)
    ref32 = _reference(x, w_red, gamma, beta, input_resolution=(H, W))
    assert out32.shape == (B, (H // 2) * (W // 2), C2), out32.shape
    assert jnp.allclose(out32, ref32, atol=1e-3, rtol=1e-3), "f32 mismatch vs reference"

    # 2) Fast path: bf16 streamed operands, f32 accumulation / LN statistics.
    params_bf = prepare_patch_merging_params(w_red, gamma, beta)   # bf16 weights
    x_bf = x.astype(jnp.bfloat16)
    out_bf = patch_merging(x_bf, *params_bf, input_resolution=(H, W))
    out_bf = jax.block_until_ready(out_bf)
    ref_mixed = _reference(x_bf.astype(jnp.float32),
                           w_red.astype(jnp.bfloat16).astype(jnp.float32),
                           gamma, beta, input_resolution=(H, W))
    assert out_bf.dtype == jnp.bfloat16
    assert out_bf.shape == (B, (H // 2) * (W // 2), C2), out_bf.shape
    assert jnp.allclose(out_bf.astype(jnp.float32), ref_mixed,
                        atol=5e-2, rtol=5e-2), "bf16 mismatch vs reference"

    print("KERNEL_OK")
</pallas_src>

<mosaic_0001>
module attributes {stable_mosaic.version = 11 : i64} {
  func.func @_patch_merging_kernel(%arg0: i32, %arg1: memref<2x1x8x128xf32, #tpu.memory_space<vmem>>, %arg2: memref<2x1x8x128xf32, #tpu.memory_space<vmem>>, %arg3: memref<128x128xf32, #tpu.memory_space<vmem>>, %arg4: memref<128x128xf32, #tpu.memory_space<vmem>>, %arg5: memref<1x128xf32, #tpu.memory_space<vmem>>, %arg6: memref<1x128xf32, #tpu.memory_space<vmem>>, %arg7: memref<16x128xf32, #tpu.memory_space<vmem>>) attributes {dimension_semantics = [#tpu.dimension_semantics<parallel>], iteration_bounds = array<i64: 8>, scalar_prefetch = 0 : i64, scratch_operands = 0 : i64, tpu.core_type = #tpu.core_type<tc>, window_params = [{transform_indices = @transform_0, window_bounds = array<i64: 2, 1, 8, 128>}, {transform_indices = @transform_1, window_bounds = array<i64: 2, 1, 8, 128>}, {pipeline_mode = #tpu.pipeline_mode<synchronous>, transform_indices = @transform_2, window_bounds = array<i64: 128, 128>}, {pipeline_mode = #tpu.pipeline_mode<synchronous>, transform_indices = @transform_3, window_bounds = array<i64: 128, 128>}, {pipeline_mode = #tpu.pipeline_mode<synchronous>, transform_indices = @transform_4, window_bounds = array<i64: 1, 128>}, {pipeline_mode = #tpu.pipeline_mode<synchronous>, transform_indices = @transform_5, window_bounds = array<i64: 1, 128>}, {transform_indices = @transform_6, window_bounds = array<i64: 16, 128>}]} {
    %c0 = arith.constant 0 : index
    %c0_0 = arith.constant 0 : index
    %c0_1 = arith.constant 0 : index
    %c0_2 = arith.constant 0 : index
    %0 = vector.load %arg1[%c0, %c0_0, %c0_1, %c0_2] : memref<2x1x8x128xf32, #tpu.memory_space<vmem>>, vector<2x1x8x128xf32>
    %1 = vector.shape_cast %0 : vector<2x1x8x128xf32> to vector<2x8x128xf32>
    %2 = vector.shape_cast %1 : vector<2x8x128xf32> to vector<16x128xf32>
    %c0_3 = arith.constant 0 : index
    %c0_4 = arith.constant 0 : index
    %c0_5 = arith.constant 0 : index
    %c0_6 = arith.constant 0 : index
    %3 = vector.load %arg2[%c0_3, %c0_4, %c0_5, %c0_6] : memref<2x1x8x128xf32, #tpu.memory_space<vmem>>, vector<2x1x8x128xf32>
    %4 = vector.shape_cast %3 : vector<2x1x8x128xf32> to vector<2x8x128xf32>
    %5 = vector.shape_cast %4 : vector<2x8x128xf32> to vector<16x128xf32>
    %c0_7 = arith.constant 0 : index
    %c0_8 = arith.constant 0 : index
    %6 = vector.load %arg3[%c0_7, %c0_8] : memref<128x128xf32, #tpu.memory_space<vmem>>, vector<128x128xf32>
    %cst = arith.constant dense<0.000000e+00> : vector<16x128xf32>
    %7 = tpu.matmul %2, %6, %cst {dimension_numbers = #tpu.dot_dimension_numbers<[1], [0], [0], [1], [0, 0, 1, 1], [], []>} : vector<16x128xf32>, vector<128x128xf32>, vector<16x128xf32> -> vector<16x128xf32>
    %c0_9 = arith.constant 0 : index
    %c0_10 = arith.constant 0 : index
    %8 = vector.load %arg4[%c0_9, %c0_10] : memref<128x128xf32, #tpu.memory_space<vmem>>, vector<128x128xf32>
    %cst_11 = arith.constant dense<0.000000e+00> : vector<16x128xf32>
    %9 = tpu.matmul %5, %8, %cst_11 {dimension_numbers = #tpu.dot_dimension_numbers<[1], [0], [0], [1], [0, 0, 1, 1], [], []>} : vector<16x128xf32>, vector<128x128xf32>, vector<16x128xf32> -> vector<16x128xf32>
    %10 = arith.addf %7, %9 : vector<16x128xf32>
    %cst_12 = arith.constant dense<0.000000e+00> : vector<16xf32>
    %11 = vector.multi_reduction <add>, %10, %cst_12 [1] : vector<16x128xf32> to vector<16xf32>
    %12 = vector.shape_cast %11 : vector<16xf32> to vector<16x1xf32>
    %13 = arith.mulf %10, %10 : vector<16x128xf32>
    %cst_13 = arith.constant dense<0.000000e+00> : vector<16xf32>
    %14 = vector.multi_reduction <add>, %13, %cst_13 [1] : vector<16x128xf32> to vector<16xf32>
    %15 = vector.shape_cast %14 : vector<16xf32> to vector<16x1xf32>
    %cst_14 = arith.constant 7.812500e-03 : f32
    %16 = vector.broadcast %cst_14 : f32 to vector<16x1xf32>
    %17 = arith.mulf %12, %16 : vector<16x1xf32>
    %cst_15 = arith.constant 7.812500e-03 : f32
    %18 = vector.broadcast %cst_15 : f32 to vector<16x1xf32>
    %19 = arith.mulf %15, %18 : vector<16x1xf32>
    %20 = arith.mulf %17, %17 : vector<16x1xf32>
    %21 = arith.subf %19, %20 : vector<16x1xf32>
    %cst_16 = arith.constant 0.000000e+00 : f32
    %22 = vector.broadcast %cst_16 : f32 to vector<16x1xf32>
    %23 = arith.maximumf %21, %22 : vector<16x1xf32>
    %24 = vector.broadcast %17 : vector<16x1xf32> to vector<16x128xf32>
    %25 = arith.subf %10, %24 : vector<16x128xf32>
    %cst_17 = arith.constant 9.99999974E-6 : f32
    %26 = vector.broadcast %cst_17 : f32 to vector<16x1xf32>
    %27 = arith.addf %23, %26 : vector<16x1xf32>
    %28 = math.rsqrt %27 : vector<16x1xf32>
    %29 = vector.broadcast %28 : vector<16x1xf32> to vector<16x128xf32>
    %30 = arith.mulf %25, %29 : vector<16x128xf32>
    %c0_18 = arith.constant 0 : index
    %c0_19 = arith.constant 0 : index
    %31 = vector.load %arg5[%c0_18, %c0_19] : memref<1x128xf32, #tpu.memory_space<vmem>>, vector<1x128xf32>
    %32 = vector.broadcast %31 : vector<1x128xf32> to vector<16x128xf32>
    %33 = arith.mulf %30, %32 : vector<16x128xf32>
    %c0_20 = arith.constant 0 : index
    %c0_21 = arith.constant 0 : index
    %34 = vector.load %arg6[%c0_20, %c0_21] : memref<1x128xf32, #tpu.memory_space<vmem>>, vector<1x128xf32>
    %35 = vector.broadcast %34 : vector<1x128xf32> to vector<16x128xf32>
    %36 = arith.addf %33, %35 : vector<16x128xf32>
    %c0_22 = arith.constant 0 : index
    %c0_23 = arith.constant 0 : index
    %37 = vector.load %arg7[%c0_22, %c0_23] : memref<16x128xf32, #tpu.memory_space<vmem>>, vector<16x128xf32>
    tpu.vector_store %arg7[%c0_22, %c0_23], %36 {strides = array<i32>} : memref<16x128xf32, #tpu.memory_space<vmem>>, vector<16x128xf32>,
    return
  }
  func.func @transform_0(%arg0: i32) -> (i32, i32, i32, i32) {
    %c0_i32 = arith.constant 0 : i32
    %c0_i32_0 = arith.constant 0 : i32
    %c0_i32_1 = arith.constant 0 : i32
    %c0_i32_2 = arith.constant 0 : i32
    return %arg0, %c0_i32, %c0_i32_0, %c0_i32_1 : i32, i32, i32, i32
  }
  func.func @transform_1(%arg0: i32) -> (i32, i32, i32, i32) {
    %c1_i32 = arith.constant 1 : i32
    %c0_i32 = arith.constant 0 : i32
    %c0_i32_0 = arith.constant 0 : i32
    %c0_i32_1 = arith.constant 0 : i32
    return %arg0, %c1_i32, %c0_i32, %c0_i32_0 : i32, i32, i32, i32
  }
  func.func @transform_2(%arg0: i32) -> (i32, i32) {
    %c0_i32 = arith.constant 0 : i32
    %c0_i32_0 = arith.constant 0 : i32
    %c0_i32_1 = arith.constant 0 : i32
    return %c0_i32, %c0_i32_0 : i32, i32
  }
  func.func @transform_3(%arg0: i32) -> (i32, i32) {
    %c0_i32 = arith.constant 0 : i32
    %c0_i32_0 = arith.constant 0 : i32
    %c0_i32_1 = arith.constant 0 : i32
    return %c0_i32, %c0_i32_0 : i32, i32
  }
  func.func @transform_4(%arg0: i32) -> (i32, i32) {
    %c0_i32 = arith.constant 0 : i32
    %c0_i32_0 = arith.constant 0 : i32
    %c0_i32_1 = arith.constant 0 : i32
    return %c0_i32, %c0_i32_0 : i32, i32
  }
  func.func @transform_5(%arg0: i32) -> (i32, i32) {
    %c0_i32 = arith.constant 0 : i32
    %c0_i32_0 = arith.constant 0 : i32
    %c0_i32_1 = arith.constant 0 : i32
    return %c0_i32, %c0_i32_0 : i32, i32
  }
  func.func @transform_6(%arg0: i32) -> (i32, i32) {
    %c0_i32 = arith.constant 0 : i32
    %c0_i32_0 = arith.constant 0 : i32
    return %arg0, %c0_i32 : i32, i32
  }
}

module attributes {stable_mosaic.version = 11 : i64} {
  func.func @_patch_merging_kernel(%arg0: i32, %arg1: memref<2x1x8x128xf32, #tpu.memory_space<vmem>>, %arg2: memref<2x1x8x128xf32, #tpu.memory_space<vmem>>, %arg3: memref<128x128xf32, #tpu.memory_space<vmem>>, %arg4: memref<128x128xf32, #tpu.memory_space<vmem>>, %arg5: memref<1x128xf32, #tpu.memory_space<vmem>>, %arg6: memref<1x128xf32, #tpu.memory_space<vmem>>, %arg7: memref<16x128xf32, #tpu.memory_space<vmem>>) attributes {dimension_semantics = [#tpu.dimension_semantics<parallel>], iteration_bounds = array<i64: 8>, scalar_prefetch = 0 : i64, scratch_operands = 0 : i64, tpu.core_type = #tpu.core_type<tc>, window_params = [{transform_indices = @transform_0, window_bounds = array<i64: 2, 1, 8, 128>}, {transform_indices = @transform_1, window_bounds = array<i64: 2, 1, 8, 128>}, {pipeline_mode = #tpu.pipeline_mode<synchronous>, transform_indices = @transform_2, window_bounds = array<i64: 128, 128>}, {pipeline_mode = #tpu.pipeline_mode<synchronous>, transform_indices = @transform_3, window_bounds = array<i64: 128, 128>}, {pipeline_mode = #tpu.pipeline_mode<synchronous>, transform_indices = @transform_4, window_bounds = array<i64: 1, 128>}, {pipeline_mode = #tpu.pipeline_mode<synchronous>, transform_indices = @transform_5, window_bounds = array<i64: 1, 128>}, {transform_indices = @transform_6, window_bounds = array<i64: 16, 128>}]} {
    %c0 = arith.constant 0 : index
    %c0_0 = arith.constant 0 : index
    %c0_1 = arith.constant 0 : index
    %c0_2 = arith.constant 0 : index
    %0 = vector.load %arg1[%c0, %c0_0, %c0_1, %c0_2] : memref<2x1x8x128xf32, #tpu.memory_space<vmem>>, vector<2x1x8x128xf32>
    %1 = vector.shape_cast %0 : vector<2x1x8x128xf32> to vector<2x8x128xf32>
    %2 = vector.shape_cast %1 : vector<2x8x128xf32> to vector<16x128xf32>
    %c0_3 = arith.constant 0 : index
    %c0_4 = arith.constant 0 : index
    %c0_5 = arith.constant 0 : index
    %c0_6 = arith.constant 0 : index
    %3 = vector.load %arg2[%c0_3, %c0_4, %c0_5, %c0_6] : memref<2x1x8x128xf32, #tpu.memory_space<vmem>>, vector<2x1x8x128xf32>
    %4 = vector.shape_cast %3 : vector<2x1x8x128xf32> to vector<2x8x128xf32>
    %5 = vector.shape_cast %4 : vector<2x8x128xf32> to vector<16x128xf32>
    %c0_7 = arith.constant 0 : index
    %c0_8 = arith.constant 0 : index
    %6 = vector.load %arg3[%c0_7, %c0_8] : memref<128x128xf32, #tpu.memory_space<vmem>>, vector<128x128xf32>
    %cst = arith.constant dense<0.000000e+00> : vector<16x128xf32>
    %7 = tpu.matmul %2, %6, %cst {dimension_numbers = #tpu.dot_dimension_numbers<[1], [0], [0], [1], [0, 0, 1, 1], [], []>} : vector<16x128xf32>, vector<128x128xf32>, vector<16x128xf32> -> vector<16x128xf32>
    %c0_9 = arith.constant 0 : index
    %c0_10 = arith.constant 0 : index
    %8 = vector.load %arg4[%c0_9, %c0_10] : memref<128x128xf32, #tpu.memory_space<vmem>>, vector<128x128xf32>
    %cst_11 = arith.constant dense<0.000000e+00> : vector<16x128xf32>
    %9 = tpu.matmul %5, %8, %cst_11 {dimension_numbers = #tpu.dot_dimension_numbers<[1], [0], [0], [1], [0, 0, 1, 1], [], []>} : vector<16x128xf32>, vector<128x128xf32>, vector<16x128xf32> -> vector<16x128xf32>
    %10 = arith.addf %7, %9 : vector<16x128xf32>
    %cst_12 = arith.constant dense<0.000000e+00> : vector<16xf32>
    %11 = vector.multi_reduction <add>, %10, %cst_12 [1] : vector<16x128xf32> to vector<16xf32>
    %12 = vector.shape_cast %11 : vector<16xf32> to vector<16x1xf32>
    %13 = arith.mulf %10, %10 : vector<16x128xf32>
    %cst_13 = arith.constant dense<0.000000e+00> : vector<16xf32>
    %14 = vector.multi_reduction <add>, %13, %cst_13 [1] : vector<16x128xf32> to vector<16xf32>
    %15 = vector.shape_cast %14 : vector<16xf32> to vector<16x1xf32>
    %cst_14 = arith.constant 7.812500e-03 : f32
    %16 = vector.broadcast %cst_14 : f32 to vector<16x1xf32>
    %17 = arith.mulf %12, %16 : vector<16x1xf32>
    %cst_15 = arith.constant 7.812500e-03 : f32
    %18 = vector.broadcast %cst_15 : f32 to vector<16x1xf32>
    %19 = arith.mulf %15, %18 : vector<16x1xf32>
    %20 = arith.mulf %17, %17 : vector<16x1xf32>
    %21 = arith.subf %19, %20 : vector<16x1xf32>
    %cst_16 = arith.constant 0.000000e+00 : f32
    %22 = vector.broadcast %cst_16 : f32 to vector<16x1xf32>
    %23 = arith.maximumf %21, %22 : vector<16x1xf32>
    %24 = vector.broadcast %17 : vector<16x1xf32> to vector<16x128xf32>
    %25 = arith.subf %10, %24 : vector<16x128xf32>
    %cst_17 = arith.constant 9.99999974E-6 : f32
    %26 = vector.broadcast %cst_17 : f32 to vector<16x1xf32>
    %27 = arith.addf %23, %26 : vector<16x1xf32>
    %28 = math.rsqrt %27 : vector<16x1xf32>
    %29 = vector.broadcast %28 : vector<16x1xf32> to vector<16x128xf32>
    %30 = arith.mulf %25, %29 : vector<16x128xf32>
    %c0_18 = arith.constant 0 : index
    %c0_19 = arith.constant 0 : index
    %31 = vector.load %arg5[%c0_18, %c0_19] : memref<1x128xf32, #tpu.memory_space<vmem>>, vector<1x128xf32>
    %32 = vector.broadcast %31 : vector<1x128xf32> to vector<16x128xf32>
    %33 = arith.mulf %30, %32 : vector<16x128xf32>
    %c0_20 = arith.constant 0 : index
    %c0_21 = arith.constant 0 : index
    %34 = vector.load %arg6[%c0_20, %c0_21] : memref<1x128xf32, #tpu.memory_space<vmem>>, vector<1x128xf32>
    %35 = vector.broadcast %34 : vector<1x128xf32> to vector<16x128xf32>
    %36 = arith.addf %33, %35 : vector<16x128xf32>
    %c0_22 = arith.constant 0 : index
    %c0_23 = arith.constant 0 : index
    %37 = vector.load %arg7[%c0_22, %c0_23] : memref<16x128xf32, #tpu.memory_space<vmem>>, vector<16x128xf32>
    tpu.vector_store %arg7[%c0_22, %c0_23], %36 {strides = array<i32>} : memref<16x128xf32, #tpu.memory_space<vmem>>, vector<16x128xf32>,
    return
  }
  func.func @transform_0(%arg0: i32) -> (i32, i32, i32, i32) {
    %c0_i32 = arith.constant 0 : i32
    %c0_i32_0 = arith.constant 0 : i32
    %c0_i32_1 = arith.constant 0 : i32
    %c0_i32_2 = arith.constant 0 : i32
    return %arg0, %c0_i32, %c0_i32_0, %c0_i32_1 : i32, i32, i32, i32
  }
  func.func @transform_1(%arg0: i32) -> (i32, i32, i32, i32) {
    %c1_i32 = arith.constant 1 : i32
    %c0_i32 = arith.constant 0 : i32
    %c0_i32_0 = arith.constant 0 : i32
    %c0_i32_1 = arith.constant 0 : i32
    return %arg0, %c1_i32, %c0_i32, %c0_i32_0 : i32, i32, i32, i32
  }
  func.func @transform_2(%arg0: i32) -> (i32, i32) {
    %c0_i32 = arith.constant 0 : i32
    %c0_i32_0 = arith.constant 0 : i32
    %c0_i32_1 = arith.constant 0 : i32
    return %c0_i32, %c0_i32_0 : i32, i32
  }
  func.func @transform_3(%arg0: i32) -> (i32, i32) {
    %c0_i32 = arith.constant 0 : i32
    %c0_i32_0 = arith.constant 0 : i32
    %c0_i32_1 = arith.constant 0 : i32
    return %c0_i32, %c0_i32_0 : i32, i32
  }
  func.func @transform_4(%arg0: i32) -> (i32, i32) {
    %c0_i32 = arith.constant 0 : i32
    %c0_i32_0 = arith.constant 0 : i32
    %c0_i32_1 = arith.constant 0 : i32
    return %c0_i32, %c0_i32_0 : i32, i32
  }
  func.func @transform_5(%arg0: i32) -> (i32, i32) {
    %c0_i32 = arith.constant 0 : i32
    %c0_i32_0 = arith.constant 0 : i32
    %c0_i32_1 = arith.constant 0 : i32
    return %c0_i32, %c0_i32_0 : i32, i32
  }
  func.func @transform_6(%arg0: i32) -> (i32, i32) {
    %c0_i32 = arith.constant 0 : i32
    %c0_i32_0 = arith.constant 0 : i32
    return %arg0, %c0_i32 : i32, i32
  }
}

</mosaic_0001>

<llo_original>
// kernel: tpu_custom_call.1
$region0: #{tpu_custom_call.1}
  #allocation0 [shape = 'u32[]', space=smem, size = 0x4, offset = 0x4, fixed_abs, tag = 'smem constant byte address 0x4 - core index']
  #allocation1 [shape = 'u32[144,128]{1,0:T(1,128)}', space=vmem, size = 0x12000, scoped, tag = 'internal scratch']
  %s0 = inlined_call_operand.hbm [shape: f32[16,2,8,128], index: 0, kind: input, shape index: {}]
  %s1 = inlined_call_operand.hbm [shape: f32[16,2,8,128], index: 1, kind: input, shape index: {}]
  %s2 = inlined_call_operand.hbm [shape: f32[128,128], index: 2, kind: input, shape index: {}]
  %s3 = inlined_call_operand.hbm [shape: f32[128,128], index: 3, kind: input, shape index: {}]
  %s4 = inlined_call_operand.vmem [shape: f32[1,128], index: 4, kind: input, shape index: {}]
  %s5 = inlined_call_operand.vmem [shape: f32[1,128], index: 5, kind: input, shape index: {}]
  %s6 = inlined_call_operand.hbm [shape: f32[128,128], index: 6, kind: output, shape index: {}]
  %s7 = sld [smem:[#allocation0]]
  $region73: #{tpu_custom_call.1} parent=0
    _
  %s9 = ssub.s32 1, %s7
  %s10 = scalar_select 0, %s9, %s7
  $region1: #{tpu_custom_call.1} parent=0
    #allocation2 [shape = 'u8[16384]{0}', space=vmem, size = 0x4000, scoped, tag = 'input window, operand 0']
    #allocation3 [shape = 's32[2]{0}', space=sflag, size = 0x8, scoped, tag = 'scoped memory for tpu_custom_call.1']
    #allocation4 [shape = 's32[2]{0}', space=sflag, size = 0x8, scoped, tag = 'scoped memory for tpu_custom_call.1']
    #allocation5 [shape = 'u8[16384]{0}', space=vmem, size = 0x4000, scoped, tag = 'input window, operand 1']
    #allocation6 [shape = 's32[2]{0}', space=sflag, size = 0x8, scoped, tag = 'scoped memory for tpu_custom_call.1']
    #allocation7 [shape = 'u8[65536]{0}', space=vmem, size = 0x10000, scoped, tag = 'input window, operand 2, single buffered']
    #allocation8 [shape = 'u8[65536]{0}', space=vmem, size = 0x10000, scoped, tag = 'input window, operand 3, single buffered']
    #allocation9 [shape = 's32[1]{0}', space=sflag, size = 0x4, scoped, tag = 'scoped memory for tpu_custom_call.1']
    #allocation10 [shape = 'u8[16384]{0}', space=vmem, size = 0x4000, scoped, tag = 'output window, operand 0']
    %11 = vsyncpa [#allocation3], 0
    %s12 = scalar_lea.sflag [#allocation3], 1
    %13 = vsyncpa %s12, 0
    %14 = vsyncpa [#allocation6], 0
    %s15 = scalar_lea.sflag [#allocation6], 1
    %16 = vsyncpa %s15, 0
    %17 = vsyncpa [#allocation9], 0
    %18 = vsyncpa [#allocation4], 0
    %s19 = scalar_lea.sflag [#allocation4], 1
    %20 = vsyncpa %s19, 0
    loop: start=0, step=1, limit=10
    $region2: #{tpu_custom_call.1} parent=1 // loop_pre_header
      _
    $region3: #{tpu_custom_call.1} parent=1 // loop_header
      %s22 = sphi 0, %s26
      %p23 = scmp.ge.s32.totalorder %s22, 10
      %s32 = sphi 0, %s34
      %s35 = sphi 0, %s32
      %s36 = sphi 0, %s35
      %s52 = sphi 0, %s36
      %s58 = sphi 0, %s60
      %s61 = sphi 0, %s58
      %s62 = sphi 0, %s61
      %s78 = sphi 0, %s62
      %s82 = sphi 0, %s82
      %s84 = sphi 0, %s82
      %s85 = sphi 0, %s84
      %s99 = sphi 0, %s85
      %s103 = sphi 0, %s103
      %s105 = sphi 0, %s103
      %s106 = sphi 0, %s105
      %s120 = sphi 0, %s106
      %s124 = sphi 0, %s124
      %s126 = sphi 0, %s124
      %s127 = sphi 0, %s126
      %s141 = sphi 0, %s127
      %s145 = sphi 0, %s145
      %s147 = sphi 0, %s145
      %s148 = sphi 0, %s147
      %s162 = sphi 0, %s148
      %s168 = sphi 0, %s170
      %s171 = sphi 0, %s168
      %s172 = sphi 0, %s171
      %s188 = sphi 0, %s172
    $region4: #{tpu_custom_call.1} parent=1 // loop_header_branch
      %25 = sbr.rel (%p23) target = $region8
    $region5: #{tpu_custom_call.1} parent=1 // loop_body
      %s27 = ssub.s32 %s22, 1
      %s28 = ssub.s32 %s22, 2
      %s29 = sadd.s32 %s22, 1
      %s30 = ssub.s32 %s22, %s29
      %p31 = scmp.eq.s32.totalorder %s30, 0
      %s33 = sadd.s32 %s32, 1
      %s34 = scalar_select %p31, %s32, %s33
      %p37 = pneg %p31
      %p38 = scmp.eq.s32.totalorder %s22, 7
      %p39 = por %p37, %p38
      %p40 = scmp.ne.s32.totalorder %s32, %s35
      %p41 = scmp.eq.s32.totalorder %s22, 0
      %p42 = por %p40, %p41
      %p43 = scmp.ne.s32.totalorder %s32, %s35
      %p44 = scmp.eq.s32.totalorder %s27, 7
      %p45 = por %p43, %p44
      %p46 = scmp.ne.s32.totalorder %s35, %s36
      %p47 = scmp.eq.s32.totalorder %s27, 0
      %p48 = por %p46, %p47
      %p49 = scmp.ne.s32.totalorder %s35, %s36
      %p50 = scmp.eq.s32.totalorder %s28, 7
      %p51 = por %p49, %p50
      %p53 = scmp.ne.s32.totalorder %s36, %s52
      %p54 = scmp.eq.s32.totalorder %s28, 0
      %p55 = por %p53, %p54
      %s56 = ssub.s32 %s22, %s29
      %p57 = scmp.eq.s32.totalorder %s56, 0
      %s59 = sadd.s32 %s58, 1
      %s60 = scalar_select %p57, %s58, %s59
      %p63 = pneg %p57
      %p64 = scmp.eq.s32.totalorder %s22, 7
      %p65 = por %p63, %p64
      %p66 = scmp.ne.s32.totalorder %s58, %s61
      %p67 = scmp.eq.s32.totalorder %s22, 0
      %p68 = por %p66, %p67
      %p69 = scmp.ne.s32.totalorder %s58, %s61
      %p70 = scmp.eq.s32.totalorder %s27, 7
      %p71 = por %p69, %p70
      %p72 = scmp.ne.s32.totalorder %s61, %s62
      %p73 = scmp.eq.s32.totalorder %s27, 0
      %p74 = por %p72, %p73
      %p75 = scmp.ne.s32.totalorder %s61, %s62
      %p76 = scmp.eq.s32.totalorder %s28, 7
      %p77 = por %p75, %p76
      %p79 = scmp.ne.s32.totalorder %s62, %s78
      %p80 = scmp.eq.s32.totalorder %s28, 0
      %p81 = por %p79, %p80
      %s83 = sadd.s32 %s82, 1
      %p86 = scmp.eq.s32.totalorder %s22, 7
      %p87 = scmp.ne.s32.totalorder %s82, %s84
      %p88 = scmp.eq.s32.totalorder %s22, 0
      %p89 = por %p87, %p88
      %p90 = scmp.ne.s32.totalorder %s82, %s84
      %p91 = scmp.eq.s32.totalorder %s27, 7
      %p92 = por %p90, %p91
      %p93 = scmp.ne.s32.totalorder %s84, %s85
      %p94 = scmp.eq.s32.totalorder %s27, 0
      %p95 = por %p93, %p94
      %p96 = scmp.ne.s32.totalorder %s84, %s85
      %p97 = scmp.eq.s32.totalorder %s28, 7
      %p98 = por %p96, %p97
      %p100 = scmp.ne.s32.totalorder %s85, %s99
      %p101 = scmp.eq.s32.totalorder %s28, 0
      %p102 = por %p100, %p101
      %s104 = sadd.s32 %s103, 1
      %p107 = scmp.eq.s32.totalorder %s22, 7
      %p108 = scmp.ne.s32.totalorder %s103, %s105
      %p109 = scmp.eq.s32.totalorder %s22, 0
      %p110 = por %p108, %p109
      %p111 = scmp.ne.s32.totalorder %s103, %s105
      %p112 = scmp.eq.s32.totalorder %s27, 7
      %p113 = por %p111, %p112
      %p114 = scmp.ne.s32.totalorder %s105, %s106
      %p115 = scmp.eq.s32.totalorder %s27, 0
      %p116 = por %p114, %p115
      %p117 = scmp.ne.s32.totalorder %s105, %s106
      %p118 = scmp.eq.s32.totalorder %s28, 7
      %p119 = por %p117, %p118
      %p121 = scmp.ne.s32.totalorder %s106, %s120
      %p122 = scmp.eq.s32.totalorder %s28, 0
      %p123 = por %p121, %p122
      %s125 = sadd.s32 %s124, 1
      %p128 = scmp.eq.s32.totalorder %s22, 7
      %p129 = scmp.ne.s32.totalorder %s124, %s126
      %p130 = scmp.eq.s32.totalorder %s22, 0
      %p131 = por %p129, %p130
      %p132 = scmp.ne.s32.totalorder %s124, %s126
      %p133 = scmp.eq.s32.totalorder %s27, 7
      %p134 = por %p132, %p133
      %p135 = scmp.ne.s32.totalorder %s126, %s127
      %p136 = scmp.eq.s32.totalorder %s27, 0
      %p137 = por %p135, %p136
      %p138 = scmp.ne.s32.totalorder %s126, %s127
      %p139 = scmp.eq.s32.totalorder %s28, 7
      %p140 = por %p138, %p139
      %p142 = scmp.ne.s32.totalorder %s127, %s141
      %p143 = scmp.eq.s32.totalorder %s28, 0
      %p144 = por %p142, %p143
      %s146 = sadd.s32 %s145, 1
      %p149 = scmp.eq.s32.totalorder %s22, 7
      %p150 = scmp.ne.s32.totalorder %s145, %s147
      %p151 = scmp.eq.s32.totalorder %s22, 0
      %p152 = por %p150, %p151
      %p153 = scmp.ne.s32.totalorder %s145, %s147
      %p154 = scmp.eq.s32.totalorder %s27, 7
      %p155 = por %p153, %p154
      %p156 = scmp.ne.s32.totalorder %s147, %s148
      %p157 = scmp.eq.s32.totalorder %s27, 0
      %p158 = por %p156, %p157
      %p159 = scmp.ne.s32.totalorder %s147, %s148
      %p160 = scmp.eq.s32.totalorder %s28, 7
      %p161 = por %p159, %p160
      %p163 = scmp.ne.s32.totalorder %s148, %s162
      %p164 = scmp.eq.s32.totalorder %s28, 0
      %p165 = por %p163, %p164
      %s166 = ssub.s32 %s22, %s29
      %p167 = scmp.eq.s32.totalorder %s166, 0
      %s169 = sadd.s32 %s168, 1
      %s170 = scalar_select %p167, %s168, %s169
      %p173 = pneg %p167
      %p174 = scmp.eq.s32.totalorder %s22, 7
      %p175 = por %p173, %p174
      %p176 = scmp.ne.s32.totalorder %s168, %s171
      %p177 = scmp.eq.s32.totalorder %s22, 0
      %p178 = por %p176, %p177
      %p179 = scmp.ne.s32.totalorder %s168, %s171
      %p180 = scmp.eq.s32.totalorder %s27, 7
      %p181 = por %p179, %p180
      %p182 = scmp.ne.s32.totalorder %s171, %s172
      %p183 = scmp.eq.s32.totalorder %s27, 0
      %p184 = por %p182, %p183
      %p185 = scmp.ne.s32.totalorder %s171, %s172
      %p186 = scmp.eq.s32.totalorder %s28, 7
      %p187 = por %p185, %p186
      %p189 = scmp.ne.s32.totalorder %s172, %s188
      %p190 = scmp.eq.s32.totalorder %s28, 0
      %p191 = por %p189, %p190
      %p192 = scmp.le.s32.totalorder 1, %s22
      %p193 = scmp.lt.s32.totalorder %s22, 9
      %p194 = pnand %p192, %p193
      %p195 = pneg %p194
      // Predicated region
      $region9: #{tpu_custom_call.1} parent=5 // pred_check
        _
      $region10: #{tpu_custom_call.1} parent=5 // pred_check_branch
        %197 = sbr.rel (%p194) target = $region12
      $region11: #{tpu_custom_call.1} parent=5 // pred_region
        %s198 = ssub.s32 %s22, 1
        // Predicated region
        $region13: #{tpu_custom_call.1} parent=11 // pred_check
          %p199 = pneg %p95
        $region14: #{tpu_custom_call.1} parent=11 // pred_check_branch
          %201 = sbr.rel (%p199) target = $region16
        $region15: #{tpu_custom_call.1} parent=11 // pred_region
          %s203 = ssub.s32 2048, 2048
          %204 = vsyncadd [#allocation6], %s203
          %s205 = sshll.u32 [#allocation7], 4
          %s206 = int_to_ptr.vmem [resolvable:$true] %s205
          %211 = dma.hbm_to_vmem [thread:$0]  %s2, 2048, %s206, [#allocation6], 128, 128, 8
        $region16: #{tpu_custom_call.1} parent=11 // pred_fallthru
          _
        // Predicated region
        $region17: #{tpu_custom_call.1} parent=11 // pred_check
          %p212 = pneg %p116
        $region18: #{tpu_custom_call.1} parent=11 // pred_check_branch
          %214 = sbr.rel (%p212) target = $region20
        $region19: #{tpu_custom_call.1} parent=11 // pred_region
          %s216 = ssub.s32 2048, 2048
          %217 = vsyncadd [#allocation9], %s216
          %s218 = sshll.u32 [#allocation8], 4
          %s219 = int_to_ptr.vmem [resolvable:$true] %s218
          %224 = dma.hbm_to_vmem [thread:$0]  %s3, 2048, %s219, [#allocation9], 128, 128, 8
        $region20: #{tpu_custom_call.1} parent=11 // pred_fallthru
          _
        // Predicated region
        $region21: #{tpu_custom_call.1} parent=11 // pred_check
          %p225 = pneg %p137
        $region22: #{tpu_custom_call.1} parent=11 // pred_check_branch
          %227 = sbr.rel (%p225) target = $region24
        $region23: #{tpu_custom_call.1} parent=11 // pred_region
          _
        $region24: #{tpu_custom_call.1} parent=11 // pred_fallthru
          _
        // Predicated region
        $region25: #{tpu_custom_call.1} parent=11 // pred_check
          %p228 = pneg %p158
        $region26: #{tpu_custom_call.1} parent=11 // pred_check_branch
          %230 = sbr.rel (%p228) target = $region28
        $region27: #{tpu_custom_call.1} parent=11 // pred_region
          _
        $region28: #{tpu_custom_call.1} parent=11 // pred_fallthru
          _
      $region12: #{tpu_custom_call.1} parent=5 // pred_fallthru
        _
      %p231 = scmp.lt.s32.totalorder %s22, 8
      // Predicated region
      $region29: #{tpu_custom_call.1} parent=5 // pred_check
        %p232 = pneg %p231
      $region30: #{tpu_custom_call.1} parent=5 // pred_check_branch
        %234 = sbr.rel (%p232) target = $region32
      $region31: #{tpu_custom_call.1} parent=5 // pred_region
        // Predicated region
        $region33: #{tpu_custom_call.1} parent=31 // pred_check
          %p235 = pneg %p42
        $region34: #{tpu_custom_call.1} parent=31 // pred_check_branch
          %237 = sbr.rel (%p235) target = $region36
        $region35: #{tpu_custom_call.1} parent=31 // pred_region
          %s238 = sand.u32 %s32, 1
          %s239 = scalar_lea.sflag [#allocation3], %s238
          %s240 = sand.u32 %s32, 1
          %s241 = smul.addr %s240, 16
          %s242 = scalar_lea.vmem [#allocation2], %s241
          %s243 = smul.u32 2, %s22
          %s245 = ssub.s32 256, 256
          %246 = vsyncadd %s239, %s245
          %s247 = smul.addr %s243, 2
          %s248 = smul.addr %s247, 128
          %s249 = scalar_lea.hbm %s0, %s248
          %s250 = sshll.u32 %s242, 4
          %s251 = int_to_ptr.vmem [resolvable:$true] %s250
          %256 = dma.hbm_to_vmem [thread:$0]  %s249, 256, %s251, %s239, 256, 128, 8
        $region36: #{tpu_custom_call.1} parent=31 // pred_fallthru
          _
        // Predicated region
        $region37: #{tpu_custom_call.1} parent=31 // pred_check
          %p257 = pneg %p68
        $region38: #{tpu_custom_call.1} parent=31 // pred_check_branch
          %259 = sbr.rel (%p257) target = $region40
        $region39: #{tpu_custom_call.1} parent=31 // pred_region
          %s260 = sand.u32 %s22, 1
          %s261 = scalar_lea.sflag [#allocation6], %s260
          %s262 = sand.u32 %s58, 1
          %s263 = smul.addr %s262, 16
          %s264 = scalar_lea.vmem [#allocation5], %s263
          %s265 = smul.u32 2, %s22
          %s267 = ssub.s32 256, 256
          %268 = vsyncadd %s261, %s267
          %s269 = smul.addr %s265, 2
          %s270 = sadd.s32 1, %s269
          %s271 = smul.addr %s270, 128
          %s272 = scalar_lea.hbm %s1, %s271
          %s273 = sshll.u32 %s264, 4
          %s274 = int_to_ptr.vmem [resolvable:$true] %s273
          %279 = dma.hbm_to_vmem [thread:$0]  %s272, 256, %s274, %s261, 256, 128, 8
        $region40: #{tpu_custom_call.1} parent=31 // pred_fallthru
          _
      $region32: #{tpu_custom_call.1} parent=5 // pred_fallthru
        _
      %p280 = scmp.le.s32.totalorder 1, %s22
      %p281 = scmp.lt.s32.totalorder %s22, 9
      %p282 = pnand %p280, %p281
      %p283 = pneg %p282
      // Predicated region
      $region41: #{tpu_custom_call.1} parent=5 // pred_check
        _
      $region42: #{tpu_custom_call.1} parent=5 // pred_check_branch
        %285 = sbr.rel (%p282) target = $region44
      $region43: #{tpu_custom_call.1} parent=5 // pred_region
        %s286 = ssub.s32 %s22, 1
        %s287 = sand.u32 %s35, 1
        %s288 = scalar_lea.sflag [#allocation3], %s287
        %s289 = sand.u32 %s35, 1
        %s290 = smul.addr %s289, 16
        %s291 = scalar_lea.vmem [#allocation2], %s290
        // Predicated region
        $region45: #{tpu_custom_call.1} parent=43 // pred_check
          %p292 = pneg %p48
        $region46: #{tpu_custom_call.1} parent=43 // pred_check_branch
          %294 = sbr.rel (%p292) target = $region48
        $region47: #{tpu_custom_call.1} parent=43 // pred_region
          %295 = dma.done %s288, 256
        $region48: #{tpu_custom_call.1} parent=43 // pred_fallthru
          _
        %s296 = sand.u32 %s27, 1
        %s297 = scalar_lea.sflag [#allocation6], %s296
        %s298 = sand.u32 %s61, 1
        %s299 = smul.addr %s298, 16
        %s300 = scalar_lea.vmem [#allocation5], %s299
        // Predicated region
        $region49: #{tpu_custom_call.1} parent=43 // pred_check
          %p301 = pneg %p74
        $region50: #{tpu_custom_call.1} parent=43 // pred_check_branch
          %303 = sbr.rel (%p301) target = $region52
        $region51: #{tpu_custom_call.1} parent=43 // pred_region
          %304 = dma.done %s297, 256
        $region52: #{tpu_custom_call.1} parent=43 // pred_fallthru
          _
        // Predicated region
        $region53: #{tpu_custom_call.1} parent=43 // pred_check
          %p305 = pneg %p95
        $region54: #{tpu_custom_call.1} parent=43 // pred_check_branch
          %307 = sbr.rel (%p305) target = $region56
        $region55: #{tpu_custom_call.1} parent=43 // pred_region
          %308 = dma.done [#allocation6], 2048
        $region56: #{tpu_custom_call.1} parent=43 // pred_fallthru
          _
        // Predicated region
        $region57: #{tpu_custom_call.1} parent=43 // pred_check
          %p309 = pneg %p116
        $region58: #{tpu_custom_call.1} parent=43 // pred_check_branch
          %311 = sbr.rel (%p309) target = $region60
        $region59: #{tpu_custom_call.1} parent=43 // pred_region
          %312 = dma.done [#allocation9], 2048
        $region60: #{tpu_custom_call.1} parent=43 // pred_fallthru
          _
        %s313 = sand.u32 %s35, 1
        %s314 = scalar_lea.sflag [#allocation3], %s313
        %s315 = sand.u32 %s35, 1
        %s316 = smul.addr %s315, 16
        %s317 = scalar_lea.vmem [#allocation2], %s316
        %p318 = pneg %p48
        %p319 = pneg %p45
        %s320 = sand.u32 %s27, 1
        %s321 = scalar_lea.sflag [#allocation6], %s320
        %s322 = sand.u32 %s61, 1
        %s323 = smul.addr %s322, 16
        %s324 = scalar_lea.vmem [#allocation5], %s323
        %p325 = pneg %p74
        %p326 = pneg %p71
        %p327 = pneg %p95
        %p328 = pneg %p92
        %p329 = pneg %p116
        %p330 = pneg %p113
        %p331 = pneg %p137
        %p332 = pneg %p134
        %p333 = pneg %p158
        %p334 = pneg %p155
        %p335 = pneg %p184
        %p336 = pneg %p181
        %s337 = sand.u32 %s171, 1
        %s338 = scalar_lea.sflag [#allocation4], %s337
        %s339 = sand.u32 %s171, 1
        %s340 = smul.addr %s339, 16
        %s341 = scalar_lea.vmem [#allocation10], %s340
        %s342 = smul.u32 2, %s27
        %s343 = smul.u32 2, %s27
        %s344 = smul.u32 2, %s27
        %v345 = vld [vmem:[%s291] sm:$0xff]
        %v346 = vld [vmem:[%s291 + $0x8] sm:$0xff]
        %v347 = vld [vmem:[%s300] sm:$0xff]
        %v348 = vld [vmem:[%s300 + $0x8] sm:$0xff]
        %v349 = vld [vmem:[#allocation7] sm:$0xff]
        %v350 = vld [vmem:[#allocation7 + $0x8] sm:$0xff]
        %v351 = vld [vmem:[#allocation7 + $0x10] sm:$0xff]
        %v352 = vld [vmem:[#allocation7 + $0x18] sm:$0xff]
        %v353 = vld [vmem:[#allocation7 + $0x20] sm:$0xff]
        %v354 = vld [vmem:[#allocation7 + $0x28] sm:$0xff]
        %v355 = vld [vmem:[#allocation7 + $0x30] sm:$0xff]
        %v356 = vld [vmem:[#allocation7 + $0x38] sm:$0xff]
        %v357 = vld [vmem:[#allocation7 + $0x40] sm:$0xff]
        %v358 = vld [vmem:[#allocation7 + $0x48] sm:$0xff]
        %v359 = vld [vmem:[#allocation7 + $0x50] sm:$0xff]
        %v360 = vld [vmem:[#allocation7 + $0x58] sm:$0xff]
        %v361 = vld [vmem:[#allocation7 + $0x60] sm:$0xff]
        %v362 = vld [vmem:[#allocation7 + $0x68] sm:$0xff]
        %v363 = vld [vmem:[#allocation7 + $0x70] sm:$0xff]
        %v364 = vld [vmem:[#allocation7 + $0x78] sm:$0xff]
        %v365 = vld [vmem:[#allocation8] sm:$0xff]
        %v366 = vld [vmem:[#allocation8 + $0x8] sm:$0xff]
        %v367 = vld [vmem:[#allocation8 + $0x10] sm:$0xff]
        %v368 = vld [vmem:[#allocation8 + $0x18] sm:$0xff]
        %v369 = vld [vmem:[#allocation8 + $0x20] sm:$0xff]
        %v370 = vld [vmem:[#allocation8 + $0x28] sm:$0xff]
        %v371 = vld [vmem:[#allocation8 + $0x30] sm:$0xff]
        %v372 = vld [vmem:[#allocation8 + $0x38] sm:$0xff]
        %v373 = vld [vmem:[#allocation8 + $0x40] sm:$0xff]
        %v374 = vld [vmem:[#allocation8 + $0x48] sm:$0xff]
        %v375 = vld [vmem:[#allocation8 + $0x50] sm:$0xff]
        %v376 = vld [vmem:[#allocation8 + $0x58] sm:$0xff]
        %v377 = vld [vmem:[#allocation8 + $0x60] sm:$0xff]
        %v378 = vld [vmem:[#allocation8 + $0x68] sm:$0xff]
        %v379 = vld [vmem:[#allocation8 + $0x70] sm:$0xff]
        %v380 = vld [vmem:[#allocation8 + $0x78] sm:$0xff]
        %381 = vmatprep.subr.mxu0 0.0
        %382 = vmatpush1.msra.mxu0 %v365
        %383 = vmatprep.subr.mxu0 0.0
        %384 = vmatpush1.msra.mxu0 %v366
        %385 = vmatprep.subr.mxu0 0.0
        %386 = vmatpush1.msra.mxu0 %v367
        %387 = vmatprep.subr.mxu0 0.0
        %388 = vmatpush1.msra.mxu0 %v368
        %389 = vmatprep.subr.mxu0 0.0
        %390 = vmatpush1.msra.mxu0 %v369
        %391 = vmatprep.subr.mxu0 0.0
        %392 = vmatpush1.msra.mxu0 %v370
        %393 = vmatprep.subr.mxu0 0.0
        %394 = vmatpush1.msra.mxu0 %v371
        %395 = vmatprep.subr.mxu0 0.0
        %396 = vmatpush1.msra.mxu0 %v372
        %397 = vmatprep.subr.mxu0 0.0
        %398 = vmatpush1.msra.mxu0 %v373
        %399 = vmatprep.subr.mxu0 0.0
        %400 = vmatpush1.msra.mxu0 %v374
        %401 = vmatprep.subr.mxu0 0.0
        %402 = vmatpush1.msra.mxu0 %v375
        %403 = vmatprep.subr.mxu0 0.0
        %404 = vmatpush1.msra.mxu0 %v376
        %405 = vmatprep.subr.mxu0 0.0
        %406 = vmatpush1.msra.mxu0 %v377
        %407 = vmatprep.subr.mxu0 0.0
        %408 = vmatpush1.msra.mxu0 %v378
        %409 = vmatprep.subr.mxu0 0.0
        %410 = vmatpush1.msra.mxu0 %v379
        %411 = vmatprep.subr.mxu0 0.0
        %412 = vmatpush1.msra.mxu0 %v380
        %413 = vmatprep.subr.mxu0 0.0
        %414 = vmatpush1.msra.mxu0 0.0
        %415 = vmatprep.subr.mxu0 0.0
        %416 = vmatpush1.msra.mxu0 0.0
        %417 = vmatprep.subr.mxu0 0.0
        %418 = vmatpush1.msra.mxu0 0.0
        %419 = vmatprep.subr.mxu0 0.0
        %420 = vmatpush1.msra.mxu0 0.0
        %421 = vmatprep.subr.mxu0 0.0
        %422 = vmatpush1.msra.mxu0 0.0
        %423 = vmatprep.subr.mxu0 0.0
        %424 = vmatpush1.msra.mxu0 0.0
        %425 = vmatprep.subr.mxu0 0.0
        %426 = vmatpush1.msra.mxu0 0.0
        %427 = vmatprep.subr.mxu0 0.0
        %428 = vmatpush1.msra.mxu0 0.0
        %429 = vmatprep.subr.mxu0 0.0
        %430 = vmatpush1.msra.mxu0 0.0
        %431 = vmatprep.subr.mxu0 0.0
        %432 = vmatpush1.msra.mxu0 0.0
        %433 = vmatprep.subr.mxu0 0.0
        %434 = vmatpush1.msra.mxu0 0.0
        %435 = vmatprep.subr.mxu0 0.0
        %436 = vmatpush1.msra.mxu0 0.0
        %437 = vmatprep.subr.mxu0 0.0
        %438 = vmatpush1.msra.mxu0 0.0
        %439 = vmatprep.subr.mxu0 0.0
        %440 = vmatpush1.msra.mxu0 0.0
        %441 = vmatprep.subr.mxu0 0.0
        %442 = vmatpush1.msra.mxu0 0.0
        %443 = vmatprep.subr.mxu0 0.0
        %444 = vmatpush1.msra.mxu0 0.0
        %445 = vmatprep.mubr.f32.mxu0 0.0
        %446 = vmatmul.mubr.f32.gmra.mrb[0].mxu0 %v347
        %v447 = vpop.f32.mrb[0].mxu0
        %v448 = vadd.f32 0.0, %v447
        %v449 = vpop.f32.mrb[0].mxu0
        %450 = vmatprep.mubr.f32.mxu0 0.0
        %451 = vmatmul.mubr.f32.gmra.mrb[0].mxu0 %v348
        %v452 = vpop.f32.mrb[0].mxu0
        %v453 = vadd.f32 0.0, %v452
        %v454 = vpop.f32.mrb[0].mxu0
        %455 = vdwg.mxu0
        %456 = vmatprep.subr.mxu0 0.0
        %457 = vmatpush1.msra.mxu0 %v349
        %458 = vmatprep.subr.mxu0 0.0
        %459 = vmatpush1.msra.mxu0 %v350
        %460 = vmatprep.subr.mxu0 0.0
        %461 = vmatpush1.msra.mxu0 %v351
        %462 = vmatprep.subr.mxu0 0.0
        %463 = vmatpush1.msra.mxu0 %v352
        %464 = vmatprep.subr.mxu0 0.0
        %465 = vmatpush1.msra.mxu0 %v353
        %466 = vmatprep.subr.mxu0 0.0
        %467 = vmatpush1.msra.mxu0 %v354
        %468 = vmatprep.subr.mxu0 0.0
        %469 = vmatpush1.msra.mxu0 %v355
        %470 = vmatprep.subr.mxu0 0.0
        %471 = vmatpush1.msra.mxu0 %v356
        %472 = vmatprep.subr.mxu0 0.0
        %473 = vmatpush1.msra.mxu0 %v357
        %474 = vmatprep.subr.mxu0 0.0
        %475 = vmatpush1.msra.mxu0 %v358
        %476 = vmatprep.subr.mxu0 0.0
        %477 = vmatpush1.msra.mxu0 %v359
        %478 = vmatprep.subr.mxu0 0.0
        %479 = vmatpush1.msra.mxu0 %v360
        %480 = vmatprep.subr.mxu0 0.0
        %481 = vmatpush1.msra.mxu0 %v361
        %482 = vmatprep.subr.mxu0 0.0
        %483 = vmatpush1.msra.mxu0 %v362
        %484 = vmatprep.subr.mxu0 0.0
        %485 = vmatpush1.msra.mxu0 %v363
        %486 = vmatprep.subr.mxu0 0.0
        %487 = vmatpush1.msra.mxu0 %v364
        %488 = vmatprep.subr.mxu0 0.0
        %489 = vmatpush1.msra.mxu0 0.0
        %490 = vmatprep.subr.mxu0 0.0
        %491 = vmatpush1.msra.mxu0 0.0
        %492 = vmatprep.subr.mxu0 0.0
        %493 = vmatpush1.msra.mxu0 0.0
        %494 = vmatprep.subr.mxu0 0.0
        %495 = vmatpush1.msra.mxu0 0.0
        %496 = vmatprep.subr.mxu0 0.0
        %497 = vmatpush1.msra.mxu0 0.0
        %498 = vmatprep.subr.mxu0 0.0
        %499 = vmatpush1.msra.mxu0 0.0
        %500 = vmatprep.subr.mxu0 0.0
        %501 = vmatpush1.msra.mxu0 0.0
        %502 = vmatprep.subr.mxu0 0.0
        %503 = vmatpush1.msra.mxu0 0.0
        %504 = vmatprep.subr.mxu0 0.0
        %505 = vmatpush1.msra.mxu0 0.0
        %506 = vmatprep.subr.mxu0 0.0
        %507 = vmatpush1.msra.mxu0 0.0
        %508 = vmatprep.subr.mxu0 0.0
        %509 = vmatpush1.msra.mxu0 0.0
        %510 = vmatprep.subr.mxu0 0.0
        %511 = vmatpush1.msra.mxu0 0.0
        %512 = vmatprep.subr.mxu0 0.0
        %513 = vmatpush1.msra.mxu0 0.0
        %514 = vmatprep.subr.mxu0 0.0
        %515 = vmatpush1.msra.mxu0 0.0
        %516 = vmatprep.subr.mxu0 0.0
        %517 = vmatpush1.msra.mxu0 0.0
        %518 = vmatprep.subr.mxu0 0.0
        %519 = vmatpush1.msra.mxu0 0.0
        %520 = vmatprep.mubr.f32.mxu0 0.0
        %521 = vmatmul.mubr.f32.gmra.mrb[0].mxu0 %v345
        %v522 = vpop.f32.mrb[0].mxu0
        %v523 = vadd.f32 %v448, %v522
        %v524 = vpop.f32.mrb[0].mxu0
        %525 = vmatprep.mubr.f32.mxu0 0.0
        %526 = vmatmul.mubr.f32.gmra.mrb[0].mxu0 %v346
        %v527 = vpop.f32.mrb[0].mxu0
        %v528 = vadd.f32 %v453, %v527
        %v529 = vpop.f32.mrb[0].mxu0
        %530 = vdwg.mxu0
        %531 = vadd.xlane.f32.xlu0 %v523
        %v532 = vpop.xlane.xlu0 %531
        %533 = vadd.xlane.f32.xlu0 %v528
        %v534 = vpop.xlane.xlu0 %533
        %v535 = vmul.f32 %v523, %v523
        %v536 = vmul.f32 %v528, %v528
        %537 = vadd.xlane.f32.xlu0 %v535
        %v538 = vpop.xlane.xlu0 %537
        %539 = vadd.xlane.f32.xlu0 %v536
        %v540 = vpop.xlane.xlu0 %539
        %v541 = vmul.f32 %v532, 0.0078125
        %v542 = vmul.f32 %v534, 0.0078125
        %v543 = vmul.f32 %v538, 0.0078125
        %v544 = vmul.f32 %v540, 0.0078125
        %v545 = vmul.f32 %v541, %v541
        %v546 = vmul.f32 %v542, %v542
        %v547 = vsub.f32 %v543, %v545
        %v548 = vsub.f32 %v544, %v546
        %v549 = vmax.f32 %v547, 0.0
        %v550 = vmax.f32 %v548, 0.0
        %v551 = vsub.f32 %v523, %v541
        %v552 = vsub.f32 %v528, %v542
        %v553 = vadd.f32 %v549, 1e-05
        %v554 = vadd.f32 %v550, 1e-05
        %v555 = vrsqrt.pop %v553
        %v556 = vrsqrt.pop %v554
        %v557 = vmul.f32 %v551, %v555
        %v558 = vmul.f32 %v552, %v556
        %v559 = vld [vmem:[%s4] sm:$0x1]
        %v561 = vlaneseq
        %v562 = vshrl.u32 %v561, 7
        %v563 = vsub.s32 0, %v562
        %v564 = vrot.slane %v559, %v563
        %v566 = vmul.f32 %v557, %v564
        %v567 = vmul.f32 %v558, %v564
        %v568 = vld [vmem:[%s5] sm:$0x1]
        %v570 = vlaneseq
        %v571 = vshrl.u32 %v570, 7
        %v572 = vsub.s32 0, %v571
        %v573 = vrot.slane %v568, %v572
        %v575 = vadd.f32 %v566, %v573
        %v576 = vadd.f32 %v567, %v573
        %577 = vst [vmem:[%s341] sm:$0xff] %v575
        %578 = vst [vmem:[%s341 + $0x8] sm:$0xff] %v576
        %s579 = sand.u32 %s171, 1
        %s580 = scalar_lea.sflag [#allocation4], %s579
        %s581 = sand.u32 %s171, 1
        %s582 = smul.addr %s581, 16
        %s583 = scalar_lea.vmem [#allocation10], %s582
        // Predicated region
        $region61: #{tpu_custom_call.1} parent=43 // pred_check
          %p584 = pneg %p181
        $region62: #{tpu_custom_call.1} parent=43 // pred_check_branch
          %586 = sbr.rel (%p584) target = $region64
        $region63: #{tpu_custom_call.1} parent=43 // pred_region
          %s587 = smul.u32 2, %s27
          %s589 = ssub.s32 256, 256
          %590 = vsyncadd %s580, %s589
          %s591 = smul.addr %s587, 128
          %s592 = scalar_lea.hbm %s6, %s591
          %s593 = sshll.u32 %s583, 4
          %s594 = int_to_ptr.vmem [resolvable:$true] %s593
          %599 = dma.vmem_to_hbm [thread:$0]  %s594, 256, %s592, %s580, 128, 128, 8
        $region64: #{tpu_custom_call.1} parent=43 // pred_fallthru
          _
      $region44: #{tpu_custom_call.1} parent=5 // pred_fallthru
        _
      %p600 = scmp.le.s32.totalorder 2, %s22
      // Predicated region
      $region65: #{tpu_custom_call.1} parent=5 // pred_check
        %p601 = pneg %p600
      $region66: #{tpu_custom_call.1} parent=5 // pred_check_branch
        %603 = sbr.rel (%p601) target = $region68
      $region67: #{tpu_custom_call.1} parent=5 // pred_region
        %s604 = ssub.s32 %s22, 2
        // Predicated region
        $region69: #{tpu_custom_call.1} parent=67 // pred_check
          %p605 = pneg %p187
        $region70: #{tpu_custom_call.1} parent=67 // pred_check_branch
          %607 = sbr.rel (%p605) target = $region72
        $region71: #{tpu_custom_call.1} parent=67 // pred_region
          %s608 = sand.u32 %s172, 1
          %s609 = scalar_lea.sflag [#allocation4], %s608
          %s610 = sand.u32 %s172, 1
          %s611 = smul.addr %s610, 16
          %s612 = scalar_lea.vmem [#allocation10], %s611
          %613 = dma.done %s609, 256
        $region72: #{tpu_custom_call.1} parent=67 // pred_fallthru
          _
      $region68: #{tpu_custom_call.1} parent=5 // pred_fallthru
        _
    $region6: #{tpu_custom_call.1} parent=1 // loop_footer
      %s26 = sadd.s32 1, %s22
    $region7: #{tpu_custom_call.1} parent=1 // loop_footer_branch
      %21 = sbr.rel target = $region3
    $region8: #{tpu_custom_call.1} parent=1 // loop_exit
      _
    %614 = vsyncpa [#allocation3], 1
    %s615 = scalar_lea.sflag [#allocation3], 1
    %616 = vsyncpa %s615, 1
    %617 = vsyncpa [#allocation6], 1
    %s618 = scalar_lea.sflag [#allocation6], 1
    %619 = vsyncpa %s618, 1
    %620 = vsyncpa [#allocation9], 1
    %621 = vsyncpa [#allocation4], 1
    %s622 = scalar_lea.sflag [#allocation4], 1
    %623 = vsyncpa %s622, 1

// kernel: tpu_custom_call.1
$region0: #{tpu_custom_call.1}
  #allocation0 [shape = 'u32[]', space=smem, size = 0x4, offset = 0x4, fixed_abs, tag = 'smem constant byte address 0x4 - core index']
  #allocation1 [shape = 'u32[144,128]{1,0:T(1,128)}', space=vmem, size = 0x12000, scoped, tag = 'internal scratch']
  %s0 = inlined_call_operand.hbm [shape: f32[16,2,8,128], index: 0, kind: input, shape index: {}]
  %s1 = inlined_call_operand.hbm [shape: f32[16,2,8,128], index: 1, kind: input, shape index: {}]
  %s2 = inlined_call_operand.hbm [shape: f32[128,128], index: 2, kind: input, shape index: {}]
  %s3 = inlined_call_operand.hbm [shape: f32[128,128], index: 3, kind: input, shape index: {}]
  %s4 = inlined_call_operand.vmem [shape: f32[1,128], index: 4, kind: input, shape index: {}]
  %s5 = inlined_call_operand.vmem [shape: f32[1,128], index: 5, kind: input, shape index: {}]
  %s6 = inlined_call_operand.hbm [shape: f32[128,128], index: 6, kind: output, shape index: {}]
  %s7 = sld [smem:[#allocation0]]
  $region73: #{tpu_custom_call.1} parent=0
    _
  %s9 = ssub.s32 1, %s7
  %s10 = scalar_select 0, %s9, %s7
  $region1: #{tpu_custom_call.1} parent=0
    #allocation2 [shape = 'u8[16384]{0}', space=vmem, size = 0x4000, scoped, tag = 'input window, operand 0']
    #allocation3 [shape = 's32[2]{0}', space=sflag, size = 0x8, scoped, tag = 'scoped memory for tpu_custom_call.1']
    #allocation4 [shape = 's32[2]{0}', space=sflag, size = 0x8, scoped, tag = 'scoped memory for tpu_custom_call.1']
    #allocation5 [shape = 'u8[16384]{0}', space=vmem, size = 0x4000, scoped, tag = 'input window, operand 1']
    #allocation6 [shape = 's32[2]{0}', space=sflag, size = 0x8, scoped, tag = 'scoped memory for tpu_custom_call.1']
    #allocation7 [shape = 'u8[65536]{0}', space=vmem, size = 0x10000, scoped, tag = 'input window, operand 2, single buffered']
    #allocation8 [shape = 'u8[65536]{0}', space=vmem, size = 0x10000, scoped, tag = 'input window, operand 3, single buffered']
    #allocation9 [shape = 's32[1]{0}', space=sflag, size = 0x4, scoped, tag = 'scoped memory for tpu_custom_call.1']
    #allocation10 [shape = 'u8[16384]{0}', space=vmem, size = 0x4000, scoped, tag = 'output window, operand 0']
    %11 = vsyncpa [#allocation3], 0
    %s12 = scalar_lea.sflag [#allocation3], 1
    %13 = vsyncpa %s12, 0
    %14 = vsyncpa [#allocation6], 0
    %s15 = scalar_lea.sflag [#allocation6], 1
    %16 = vsyncpa %s15, 0
    %17 = vsyncpa [#allocation9], 0
    %18 = vsyncpa [#allocation4], 0
    %s19 = scalar_lea.sflag [#allocation4], 1
    %20 = vsyncpa %s19, 0
    loop: start=0, step=1, limit=10
    $region2: #{tpu_custom_call.1} parent=1 // loop_pre_header
      _
    $region3: #{tpu_custom_call.1} parent=1 // loop_header
      %s22 = sphi 0, %s26
      %p23 = scmp.ge.s32.totalorder %s22, 10
      %s32 = sphi 0, %s34
      %s35 = sphi 0, %s32
      %s36 = sphi 0, %s35
      %s52 = sphi 0, %s36
      %s58 = sphi 0, %s60
      %s61 = sphi 0, %s58
      %s62 = sphi 0, %s61
      %s78 = sphi 0, %s62
      %s82 = sphi 0, %s82
      %s84 = sphi 0, %s82
      %s85 = sphi 0, %s84
      %s99 = sphi 0, %s85
      %s103 = sphi 0, %s103
      %s105 = sphi 0, %s103
      %s106 = sphi 0, %s105
      %s120 = sphi 0, %s106
      %s124 = sphi 0, %s124
      %s126 = sphi 0, %s124
      %s127 = sphi 0, %s126
      %s141 = sphi 0, %s127
      %s145 = sphi 0, %s145
      %s147 = sphi 0, %s145
      %s148 = sphi 0, %s147
      %s162 = sphi 0, %s148
      %s168 = sphi 0, %s170
      %s171 = sphi 0, %s168
      %s172 = sphi 0, %s171
      %s188 = sphi 0, %s172
    $region4: #{tpu_custom_call.1} parent=1 // loop_header_branch
      %25 = sbr.rel (%p23) target = $region8
    $region5: #{tpu_custom_call.1} parent=1 // loop_body
      %s27 = ssub.s32 %s22, 1
      %s28 = ssub.s32 %s22, 2
      %s29 = sadd.s32 %s22, 1
      %s30 = ssub.s32 %s22, %s29
      %p31 = scmp.eq.s32.totalorder %s30, 0
      %s33 = sadd.s32 %s32, 1
      %s34 = scalar_select %p31, %s32, %s33
      %p37 = pneg %p31
      %p38 = scmp.eq.s32.totalorder %s22, 7
      %p39 = por %p37, %p38
      %p40 = scmp.ne.s32.totalorder %s32, %s35
      %p41 = scmp.eq.s32.totalorder %s22, 0
      %p42 = por %p40, %p41
      %p43 = scmp.ne.s32.totalorder %s32, %s35
      %p44 = scmp.eq.s32.totalorder %s27, 7
      %p45 = por %p43, %p44
      %p46 = scmp.ne.s32.totalorder %s35, %s36
      %p47 = scmp.eq.s32.totalorder %s27, 0
      %p48 = por %p46, %p47
      %p49 = scmp.ne.s32.totalorder %s35, %s36
      %p50 = scmp.eq.s32.totalorder %s28, 7
      %p51 = por %p49, %p50
      %p53 = scmp.ne.s32.totalorder %s36, %s52
      %p54 = scmp.eq.s32.totalorder %s28, 0
      %p55 = por %p53, %p54
      %s56 = ssub.s32 %s22, %s29
      %p57 = scmp.eq.s32.totalorder %s56, 0
      %s59 = sadd.s32 %s58, 1
      %s60 = scalar_select %p57, %s58, %s59
      %p63 = pneg %p57
      %p64 = scmp.eq.s32.totalorder %s22, 7
      %p65 = por %p63, %p64
      %p66 = scmp.ne.s32.totalorder %s58, %s61
      %p67 = scmp.eq.s32.totalorder %s22, 0
      %p68 = por %p66, %p67
      %p69 = scmp.ne.s32.totalorder %s58, %s61
      %p70 = scmp.eq.s32.totalorder %s27, 7
      %p71 = por %p69, %p70
      %p72 = scmp.ne.s32.totalorder %s61, %s62
      %p73 = scmp.eq.s32.totalorder %s27, 0
      %p74 = por %p72, %p73
      %p75 = scmp.ne.s32.totalorder %s61, %s62
      %p76 = scmp.eq.s32.totalorder %s28, 7
      %p77 = por %p75, %p76
      %p79 = scmp.ne.s32.totalorder %s62, %s78
      %p80 = scmp.eq.s32.totalorder %s28, 0
      %p81 = por %p79, %p80
      %s83 = sadd.s32 %s82, 1
      %p86 = scmp.eq.s32.totalorder %s22, 7
      %p87 = scmp.ne.s32.totalorder %s82, %s84
      %p88 = scmp.eq.s32.totalorder %s22, 0
      %p89 = por %p87, %p88
      %p90 = scmp.ne.s32.totalorder %s82, %s84
      %p91 = scmp.eq.s32.totalorder %s27, 7
      %p92 = por %p90, %p91
      %p93 = scmp.ne.s32.totalorder %s84, %s85
      %p94 = scmp.eq.s32.totalorder %s27, 0
      %p95 = por %p93, %p94
      %p96 = scmp.ne.s32.totalorder %s84, %s85
      %p97 = scmp.eq.s32.totalorder %s28, 7
      %p98 = por %p96, %p97
      %p100 = scmp.ne.s32.totalorder %s85, %s99
      %p101 = scmp.eq.s32.totalorder %s28, 0
      %p102 = por %p100, %p101
      %s104 = sadd.s32 %s103, 1
      %p107 = scmp.eq.s32.totalorder %s22, 7
      %p108 = scmp.ne.s32.totalorder %s103, %s105
      %p109 = scmp.eq.s32.totalorder %s22, 0
      %p110 = por %p108, %p109
      %p111 = scmp.ne.s32.totalorder %s103, %s105
      %p112 = scmp.eq.s32.totalorder %s27, 7
      %p113 = por %p111, %p112
      %p114 = scmp.ne.s32.totalorder %s105, %s106
      %p115 = scmp.eq.s32.totalorder %s27, 0
      %p116 = por %p114, %p115
      %p117 = scmp.ne.s32.totalorder %s105, %s106
      %p118 = scmp.eq.s32.totalorder %s28, 7
      %p119 = por %p117, %p118
      %p121 = scmp.ne.s32.totalorder %s106, %s120
      %p122 = scmp.eq.s32.totalorder %s28, 0
      %p123 = por %p121, %p122
      %s125 = sadd.s32 %s124, 1
      %p128 = scmp.eq.s32.totalorder %s22, 7
      %p129 = scmp.ne.s32.totalorder %s124, %s126
      %p130 = scmp.eq.s32.totalorder %s22, 0
      %p131 = por %p129, %p130
      %p132 = scmp.ne.s32.totalorder %s124, %s126
      %p133 = scmp.eq.s32.totalorder %s27, 7
      %p134 = por %p132, %p133
      %p135 = scmp.ne.s32.totalorder %s126, %s127
      %p136 = scmp.eq.s32.totalorder %s27, 0
      %p137 = por %p135, %p136
      %p138 = scmp.ne.s32.totalorder %s126, %s127
      %p139 = scmp.eq.s32.totalorder %s28, 7
      %p140 = por %p138, %p139
      %p142 = scmp.ne.s32.totalorder %s127, %s141
      %p143 = scmp.eq.s32.totalorder %s28, 0
      %p144 = por %p142, %p143
      %s146 = sadd.s32 %s145, 1
      %p149 = scmp.eq.s32.totalorder %s22, 7
      %p150 = scmp.ne.s32.totalorder %s145, %s147
      %p151 = scmp.eq.s32.totalorder %s22, 0
      %p152 = por %p150, %p151
      %p153 = scmp.ne.s32.totalorder %s145, %s147
      %p154 = scmp.eq.s32.totalorder %s27, 7
      %p155 = por %p153, %p154
      %p156 = scmp.ne.s32.totalorder %s147, %s148
      %p157 = scmp.eq.s32.totalorder %s27, 0
      %p158 = por %p156, %p157
      %p159 = scmp.ne.s32.totalorder %s147, %s148
      %p160 = scmp.eq.s32.totalorder %s28, 7
      %p161 = por %p159, %p160
      %p163 = scmp.ne.s32.totalorder %s148, %s162
      %p164 = scmp.eq.s32.totalorder %s28, 0
      %p165 = por %p163, %p164
      %s166 = ssub.s32 %s22, %s29
      %p167 = scmp.eq.s32.totalorder %s166, 0
      %s169 = sadd.s32 %s168, 1
      %s170 = scalar_select %p167, %s168, %s169
      %p173 = pneg %p167
      %p174 = scmp.eq.s32.totalorder %s22, 7
      %p175 = por %p173, %p174
      %p176 = scmp.ne.s32.totalorder %s168, %s171
      %p177 = scmp.eq.s32.totalorder %s22, 0
      %p178 = por %p176, %p177
      %p179 = scmp.ne.s32.totalorder %s168, %s171
      %p180 = scmp.eq.s32.totalorder %s27, 7
      %p181 = por %p179, %p180
      %p182 = scmp.ne.s32.totalorder %s171, %s172
      %p183 = scmp.eq.s32.totalorder %s27, 0
      %p184 = por %p182, %p183
      %p185 = scmp.ne.s32.totalorder %s171, %s172
      %p186 = scmp.eq.s32.totalorder %s28, 7
      %p187 = por %p185, %p186
      %p189 = scmp.ne.s32.totalorder %s172, %s188
      %p190 = scmp.eq.s32.totalorder %s28, 0
      %p191 = por %p189, %p190
      %p192 = scmp.le.s32.totalorder 1, %s22
      %p193 = scmp.lt.s32.totalorder %s22, 9
      %p194 = pnand %p192, %p193
      %p195 = pneg %p194
      // Predicated region
      $region9: #{tpu_custom_call.1} parent=5 // pred_check
        _
      $region10: #{tpu_custom_call.1} parent=5 // pred_check_branch
        %197 = sbr.rel (%p194) target = $region12
      $region11: #{tpu_custom_call.1} parent=5 // pred_region
        %s198 = ssub.s32 %s22, 1
        // Predicated region
        $region13: #{tpu_custom_call.1} parent=11 // pred_check
          %p199 = pneg %p95
        $region14: #{tpu_custom_call.1} parent=11 // pred_check_branch
          %201 = sbr.rel (%p199) target = $region16
        $region15: #{tpu_custom_call.1} parent=11 // pred_region
          %s203 = ssub.s32 2048, 2048
          %204 = vsyncadd [#allocation6], %s203
          %s205 = sshll.u32 [#allocation7], 4
          %s206 = int_to_ptr.vmem [resolvable:$true] %s205
          %211 = dma.hbm_to_vmem [thread:$0]  %s2, 2048, %s206, [#allocation6], 128, 128, 8
        $region16: #{tpu_custom_call.1} parent=11 // pred_fallthru
          _
        // Predicated region
        $region17: #{tpu_custom_call.1} parent=11 // pred_check
          %p212 = pneg %p116
        $region18: #{tpu_custom_call.1} parent=11 // pred_check_branch
          %214 = sbr.rel (%p212) target = $region20
        $region19: #{tpu_custom_call.1} parent=11 // pred_region
          %s216 = ssub.s32 2048, 2048
          %217 = vsyncadd [#allocation9], %s216
          %s218 = sshll.u32 [#allocation8], 4
          %s219 = int_to_ptr.vmem [resolvable:$true] %s218
          %224 = dma.hbm_to_vmem [thread:$0]  %s3, 2048, %s219, [#allocation9], 128, 128, 8
        $region20: #{tpu_custom_call.1} parent=11 // pred_fallthru
          _
        // Predicated region
        $region21: #{tpu_custom_call.1} parent=11 // pred_check
          %p225 = pneg %p137
        $region22: #{tpu_custom_call.1} parent=11 // pred_check_branch
          %227 = sbr.rel (%p225) target = $region24
        $region23: #{tpu_custom_call.1} parent=11 // pred_region
          _
        $region24: #{tpu_custom_call.1} parent=11 // pred_fallthru
          _
        // Predicated region
        $region25: #{tpu_custom_call.1} parent=11 // pred_check
          %p228 = pneg %p158
        $region26: #{tpu_custom_call.1} parent=11 // pred_check_branch
          %230 = sbr.rel (%p228) target = $region28
        $region27: #{tpu_custom_call.1} parent=11 // pred_region
          _
        $region28: #{tpu_custom_call.1} parent=11 // pred_fallthru
          _
      $region12: #{tpu_custom_call.1} parent=5 // pred_fallthru
        _
      %p231 = scmp.lt.s32.totalorder %s22, 8
      // Predicated region
      $region29: #{tpu_custom_call.1} parent=5 // pred_check
        %p232 = pneg %p231
      $region30: #{tpu_custom_call.1} parent=5 // pred_check_branch
        %234 = sbr.rel (%p232) target = $region32
      $region31: #{tpu_custom_call.1} parent=5 // pred_region
        // Predicated region
        $region33: #{tpu_custom_call.1} parent=31 // pred_check
          %p235 = pneg %p42
        $region34: #{tpu_custom_call.1} parent=31 // pred_check_branch
          %237 = sbr.rel (%p235) target = $region36
        $region35: #{tpu_custom_call.1} parent=31 // pred_region
          %s238 = sand.u32 %s32, 1
          %s239 = scalar_lea.sflag [#allocation3], %s238
          %s240 = sand.u32 %s32, 1
          %s241 = smul.addr %s240, 16
          %s242 = scalar_lea.vmem [#allocation2], %s241
          %s243 = smul.u32 2, %s22
          %s245 = ssub.s32 256, 256
          %246 = vsyncadd %s239, %s245
          %s247 = smul.addr %s243, 2
          %s248 = smul.addr %s247, 128
          %s249 = scalar_lea.hbm %s0, %s248
          %s250 = sshll.u32 %s242, 4
          %s251 = int_to_ptr.vmem [resolvable:$true] %s250
          %256 = dma.hbm_to_vmem [thread:$0]  %s249, 256, %s251, %s239, 256, 128, 8
        $region36: #{tpu_custom_call.1} parent=31 // pred_fallthru
          _
        // Predicated region
        $region37: #{tpu_custom_call.1} parent=31 // pred_check
          %p257 = pneg %p68
        $region38: #{tpu_custom_call.1} parent=31 // pred_check_branch
          %259 = sbr.rel (%p257) target = $region40
        $region39: #{tpu_custom_call.1} parent=31 // pred_region
          %s260 = sand.u32 %s22, 1
          %s261 = scalar_lea.sflag [#allocation6], %s260
          %s262 = sand.u32 %s58, 1
          %s263 = smul.addr %s262, 16
          %s264 = scalar_lea.vmem [#allocation5], %s263
          %s265 = smul.u32 2, %s22
          %s267 = ssub.s32 256, 256
          %268 = vsyncadd %s261, %s267
          %s269 = smul.addr %s265, 2
          %s270 = sadd.s32 1, %s269
          %s271 = smul.addr %s270, 128
          %s272 = scalar_lea.hbm %s1, %s271
          %s273 = sshll.u32 %s264, 4
          %s274 = int_to_ptr.vmem [resolvable:$true] %s273
          %279 = dma.hbm_to_vmem [thread:$0]  %s272, 256, %s274, %s261, 256, 128, 8
        $region40: #{tpu_custom_call.1} parent=31 // pred_fallthru
          _
      $region32: #{tpu_custom_call.1} parent=5 // pred_fallthru
        _
      %p280 = scmp.le.s32.totalorder 1, %s22
      %p281 = scmp.lt.s32.totalorder %s22, 9
      %p282 = pnand %p280, %p281
      %p283 = pneg %p282
      // Predicated region
      $region41: #{tpu_custom_call.1} parent=5 // pred_check
        _
      $region42: #{tpu_custom_call.1} parent=5 // pred_check_branch
        %285 = sbr.rel (%p282) target = $region44
      $region43: #{tpu_custom_call.1} parent=5 // pred_region
        %s286 = ssub.s32 %s22, 1
        %s287 = sand.u32 %s35, 1
        %s288 = scalar_lea.sflag [#allocation3], %s287
        %s289 = sand.u32 %s35, 1
        %s290 = smul.addr %s289, 16
        %s291 = scalar_lea.vmem [#allocation2], %s290
        // Predicated region
        $region45: #{tpu_custom_call.1} parent=43 // pred_check
          %p292 = pneg %p48
        $region46: #{tpu_custom_call.1} parent=43 // pred_check_branch
          %294 = sbr.rel (%p292) target = $region48
        $region47: #{tpu_custom_call.1} parent=43 // pred_region
          %295 = dma.done %s288, 256
        $region48: #{tpu_custom_call.1} parent=43 // pred_fallthru
          _
        %s296 = sand.u32 %s27, 1
        %s297 = scalar_lea.sflag [#allocation6], %s296
        %s298 = sand.u32 %s61, 1
        %s299 = smul.addr %s298, 16
        %s300 = scalar_lea.vmem [#allocation5], %s299
        // Predicated region
        $region49: #{tpu_custom_call.1} parent=43 // pred_check
          %p301 = pneg %p74
        $region50: #{tpu_custom_call.1} parent=43 // pred_check_branch
          %303 = sbr.rel (%p301) target = $region52
        $region51: #{tpu_custom_call.1} parent=43 // pred_region
          %304 = dma.done %s297, 256
        $region52: #{tpu_custom_call.1} parent=43 // pred_fallthru
          _
        // Predicated region
        $region53: #{tpu_custom_call.1} parent=43 // pred_check
          %p305 = pneg %p95
        $region54: #{tpu_custom_call.1} parent=43 // pred_check_branch
          %307 = sbr.rel (%p305) target = $region56
        $region55: #{tpu_custom_call.1} parent=43 // pred_region
          %308 = dma.done [#allocation6], 2048
        $region56: #{tpu_custom_call.1} parent=43 // pred_fallthru
          _
        // Predicated region
        $region57: #{tpu_custom_call.1} parent=43 // pred_check
          %p309 = pneg %p116
        $region58: #{tpu_custom_call.1} parent=43 // pred_check_branch
          %311 = sbr.rel (%p309) target = $region60
        $region59: #{tpu_custom_call.1} parent=43 // pred_region
          %312 = dma.done [#allocation9], 2048
        $region60: #{tpu_custom_call.1} parent=43 // pred_fallthru
          _
        %s313 = sand.u32 %s35, 1
        %s314 = scalar_lea.sflag [#allocation3], %s313
        %s315 = sand.u32 %s35, 1
        %s316 = smul.addr %s315, 16
        %s317 = scalar_lea.vmem [#allocation2], %s316
        %p318 = pneg %p48
        %p319 = pneg %p45
        %s320 = sand.u32 %s27, 1
        %s321 = scalar_lea.sflag [#allocation6], %s320
        %s322 = sand.u32 %s61, 1
        %s323 = smul.addr %s322, 16
        %s324 = scalar_lea.vmem [#allocation5], %s323
        %p325 = pneg %p74
        %p326 = pneg %p71
        %p327 = pneg %p95
        %p328 = pneg %p92
        %p329 = pneg %p116
        %p330 = pneg %p113
        %p331 = pneg %p137
        %p332 = pneg %p134
        %p333 = pneg %p158
        %p334 = pneg %p155
        %p335 = pneg %p184
        %p336 = pneg %p181
        %s337 = sand.u32 %s171, 1
        %s338 = scalar_lea.sflag [#allocation4], %s337
        %s339 = sand.u32 %s171, 1
        %s340 = smul.addr %s339, 16
        %s341 = scalar_lea.vmem [#allocation10], %s340
        %s342 = smul.u32 2, %s27
        %s343 = smul.u32 2, %s27
        %s344 = smul.u32 2, %s27
        %v345 = vld [vmem:[%s291] sm:$0xff]
        %v346 = vld [vmem:[%s291 + $0x8] sm:$0xff]
        %v347 = vld [vmem:[%s300] sm:$0xff]
        %v348 = vld [vmem:[%s300 + $0x8] sm:$0xff]
        %v349 = vld [vmem:[#allocation7] sm:$0xff]
        %v350 = vld [vmem:[#allocation7 + $0x8] sm:$0xff]
        %v351 = vld [vmem:[#allocation7 + $0x10] sm:$0xff]
        %v352 = vld [vmem:[#allocation7 + $0x18] sm:$0xff]
        %v353 = vld [vmem:[#allocation7 + $0x20] sm:$0xff]
        %v354 = vld [vmem:[#allocation7 + $0x28] sm:$0xff]
        %v355 = vld [vmem:[#allocation7 + $0x30] sm:$0xff]
        %v356 = vld [vmem:[#allocation7 + $0x38] sm:$0xff]
        %v357 = vld [vmem:[#allocation7 + $0x40] sm:$0xff]
        %v358 = vld [vmem:[#allocation7 + $0x48] sm:$0xff]
        %v359 = vld [vmem:[#allocation7 + $0x50] sm:$0xff]
        %v360 = vld [vmem:[#allocation7 + $0x58] sm:$0xff]
        %v361 = vld [vmem:[#allocation7 + $0x60] sm:$0xff]
        %v362 = vld [vmem:[#allocation7 + $0x68] sm:$0xff]
        %v363 = vld [vmem:[#allocation7 + $0x70] sm:$0xff]
        %v364 = vld [vmem:[#allocation7 + $0x78] sm:$0xff]
        %v365 = vld [vmem:[#allocation8] sm:$0xff]
        %v366 = vld [vmem:[#allocation8 + $0x8] sm:$0xff]
        %v367 = vld [vmem:[#allocation8 + $0x10] sm:$0xff]
        %v368 = vld [vmem:[#allocation8 + $0x18] sm:$0xff]
        %v369 = vld [vmem:[#allocation8 + $0x20] sm:$0xff]
        %v370 = vld [vmem:[#allocation8 + $0x28] sm:$0xff]
        %v371 = vld [vmem:[#allocation8 + $0x30] sm:$0xff]
        %v372 = vld [vmem:[#allocation8 + $0x38] sm:$0xff]
        %v373 = vld [vmem:[#allocation8 + $0x40] sm:$0xff]
        %v374 = vld [vmem:[#allocation8 + $0x48] sm:$0xff]
        %v375 = vld [vmem:[#allocation8 + $0x50] sm:$0xff]
        %v376 = vld [vmem:[#allocation8 + $0x58] sm:$0xff]
        %v377 = vld [vmem:[#allocation8 + $0x60] sm:$0xff]
        %v378 = vld [vmem:[#allocation8 + $0x68] sm:$0xff]
        %v379 = vld [vmem:[#allocation8 + $0x70] sm:$0xff]
        %v380 = vld [vmem:[#allocation8 + $0x78] sm:$0xff]
        %381 = vmatprep.subr.mxu0 0.0
        %382 = vmatpush1.msra.mxu0 %v365
        %383 = vmatprep.subr.mxu0 0.0
        %384 = vmatpush1.msra.mxu0 %v366
        %385 = vmatprep.subr.mxu0 0.0
        %386 = vmatpush1.msra.mxu0 %v367
        %387 = vmatprep.subr.mxu0 0.0
        %388 = vmatpush1.msra.mxu0 %v368
        %389 = vmatprep.subr.mxu0 0.0
        %390 = vmatpush1.msra.mxu0 %v369
        %391 = vmatprep.subr.mxu0 0.0
        %392 = vmatpush1.msra.mxu0 %v370
        %393 = vmatprep.subr.mxu0 0.0
        %394 = vmatpush1.msra.mxu0 %v371
        %395 = vmatprep.subr.mxu0 0.0
        %396 = vmatpush1.msra.mxu0 %v372
        %397 = vmatprep.subr.mxu0 0.0
        %398 = vmatpush1.msra.mxu0 %v373
        %399 = vmatprep.subr.mxu0 0.0
        %400 = vmatpush1.msra.mxu0 %v374
        %401 = vmatprep.subr.mxu0 0.0
        %402 = vmatpush1.msra.mxu0 %v375
        %403 = vmatprep.subr.mxu0 0.0
        %404 = vmatpush1.msra.mxu0 %v376
        %405 = vmatprep.subr.mxu0 0.0
        %406 = vmatpush1.msra.mxu0 %v377
        %407 = vmatprep.subr.mxu0 0.0
        %408 = vmatpush1.msra.mxu0 %v378
        %409 = vmatprep.subr.mxu0 0.0
        %410 = vmatpush1.msra.mxu0 %v379
        %411 = vmatprep.subr.mxu0 0.0
        %412 = vmatpush1.msra.mxu0 %v380
        %413 = vmatprep.subr.mxu0 0.0
        %414 = vmatpush1.msra.mxu0 0.0
        %415 = vmatprep.subr.mxu0 0.0
        %416 = vmatpush1.msra.mxu0 0.0
        %417 = vmatprep.subr.mxu0 0.0
        %418 = vmatpush1.msra.mxu0 0.0
        %419 = vmatprep.subr.mxu0 0.0
        %420 = vmatpush1.msra.mxu0 0.0
        %421 = vmatprep.subr.mxu0 0.0
        %422 = vmatpush1.msra.mxu0 0.0
        %423 = vmatprep.subr.mxu0 0.0
        %424 = vmatpush1.msra.mxu0 0.0
        %425 = vmatprep.subr.mxu0 0.0
        %426 = vmatpush1.msra.mxu0 0.0
        %427 = vmatprep.subr.mxu0 0.0
        %428 = vmatpush1.msra.mxu0 0.0
        %429 = vmatprep.subr.mxu0 0.0
        %430 = vmatpush1.msra.mxu0 0.0
        %431 = vmatprep.subr.mxu0 0.0
        %432 = vmatpush1.msra.mxu0 0.0
        %433 = vmatprep.subr.mxu0 0.0
        %434 = vmatpush1.msra.mxu0 0.0
        %435 = vmatprep.subr.mxu0 0.0
        %436 = vmatpush1.msra.mxu0 0.0
        %437 = vmatprep.subr.mxu0 0.0
        %438 = vmatpush1.msra.mxu0 0.0
        %439 = vmatprep.subr.mxu0 0.0
        %440 = vmatpush1.msra.mxu0 0.0
        %441 = vmatprep.subr.mxu0 0.0
        %442 = vmatpush1.msra.mxu0 0.0
        %443 = vmatprep.subr.mxu0 0.0
        %444 = vmatpush1.msra.mxu0 0.0
        %445 = vmatprep.mubr.f32.mxu0 0.0
        %446 = vmatmul.mubr.f32.gmra.mrb[0].mxu0 %v347
        %v447 = vpop.f32.mrb[0].mxu0
        %v448 = vadd.f32 0.0, %v447
        %v449 = vpop.f32.mrb[0].mxu0
        %450 = vmatprep.mubr.f32.mxu0 0.0
        %451 = vmatmul.mubr.f32.gmra.mrb[0].mxu0 %v348
        %v452 = vpop.f32.mrb[0].mxu0
        %v453 = vadd.f32 0.0, %v452
        %v454 = vpop.f32.mrb[0].mxu0
        %455 = vdwg.mxu0
        %456 = vmatprep.subr.mxu0 0.0
        %457 = vmatpush1.msra.mxu0 %v349
        %458 = vmatprep.subr.mxu0 0.0
        %459 = vmatpush1.msra.mxu0 %v350
        %460 = vmatprep.subr.mxu0 0.0
        %461 = vmatpush1.msra.mxu0 %v351
        %462 = vmatprep.subr.mxu0 0.0
        %463 = vmatpush1.msra.mxu0 %v352
        %464 = vmatprep.subr.mxu0 0.0
        %465 = vmatpush1.msra.mxu0 %v353
        %466 = vmatprep.subr.mxu0 0.0
        %467 = vmatpush1.msra.mxu0 %v354
        %468 = vmatprep.subr.mxu0 0.0
        %469 = vmatpush1.msra.mxu0 %v355
        %470 = vmatprep.subr.mxu0 0.0
        %471 = vmatpush1.msra.mxu0 %v356
        %472 = vmatprep.subr.mxu0 0.0
        %473 = vmatpush1.msra.mxu0 %v357
        %474 = vmatprep.subr.mxu0 0.0
        %475 = vmatpush1.msra.mxu0 %v358
        %476 = vmatprep.subr.mxu0 0.0
        %477 = vmatpush1.msra.mxu0 %v359
        %478 = vmatprep.subr.mxu0 0.0
        %479 = vmatpush1.msra.mxu0 %v360
        %480 = vmatprep.subr.mxu0 0.0
        %481 = vmatpush1.msra.mxu0 %v361
        %482 = vmatprep.subr.mxu0 0.0
        %483 = vmatpush1.msra.mxu0 %v362
        %484 = vmatprep.subr.mxu0 0.0
        %485 = vmatpush1.msra.mxu0 %v363
        %486 = vmatprep.subr.mxu0 0.0
        %487 = vmatpush1.msra.mxu0 %v364
        %488 = vmatprep.subr.mxu0 0.0
        %489 = vmatpush1.msra.mxu0 0.0
        %490 = vmatprep.subr.mxu0 0.0
        %491 = vmatpush1.msra.mxu0 0.0
        %492 = vmatprep.subr.mxu0 0.0
        %493 = vmatpush1.msra.mxu0 0.0
        %494 = vmatprep.subr.mxu0 0.0
        %495 = vmatpush1.msra.mxu0 0.0
        %496 = vmatprep.subr.mxu0 0.0
        %497 = vmatpush1.msra.mxu0 0.0
        %498 = vmatprep.subr.mxu0 0.0
        %499 = vmatpush1.msra.mxu0 0.0
        %500 = vmatprep.subr.mxu0 0.0
        %501 = vmatpush1.msra.mxu0 0.0
        %502 = vmatprep.subr.mxu0 0.0
        %503 = vmatpush1.msra.mxu0 0.0
        %504 = vmatprep.subr.mxu0 0.0
        %505 = vmatpush1.msra.mxu0 0.0
        %506 = vmatprep.subr.mxu0 0.0
        %507 = vmatpush1.msra.mxu0 0.0
        %508 = vmatprep.subr.mxu0 0.0
        %509 = vmatpush1.msra.mxu0 0.0
        %510 = vmatprep.subr.mxu0 0.0
        %511 = vmatpush1.msra.mxu0 0.0
        %512 = vmatprep.subr.mxu0 0.0
        %513 = vmatpush1.msra.mxu0 0.0
        %514 = vmatprep.subr.mxu0 0.0
        %515 = vmatpush1.msra.mxu0 0.0
        %516 = vmatprep.subr.mxu0 0.0
        %517 = vmatpush1.msra.mxu0 0.0
        %518 = vmatprep.subr.mxu0 0.0
        %519 = vmatpush1.msra.mxu0 0.0
        %520 = vmatprep.mubr.f32.mxu0 0.0
        %521 = vmatmul.mubr.f32.gmra.mrb[0].mxu0 %v345
        %v522 = vpop.f32.mrb[0].mxu0
        %v523 = vadd.f32 %v448, %v522
        %v524 = vpop.f32.mrb[0].mxu0
        %525 = vmatprep.mubr.f32.mxu0 0.0
        %526 = vmatmul.mubr.f32.gmra.mrb[0].mxu0 %v346
        %v527 = vpop.f32.mrb[0].mxu0
        %v528 = vadd.f32 %v453, %v527
        %v529 = vpop.f32.mrb[0].mxu0
        %530 = vdwg.mxu0
        %531 = vadd.xlane.f32.xlu0 %v523
        %v532 = vpop.xlane.xlu0 %531
        %533 = vadd.xlane.f32.xlu0 %v528
        %v534 = vpop.xlane.xlu0 %533
        %v535 = vmul.f32 %v523, %v523
        %v536 = vmul.f32 %v528, %v528
        %537 = vadd.xlane.f32.xlu0 %v535
        %v538 = vpop.xlane.xlu0 %537
        %539 = vadd.xlane.f32.xlu0 %v536
        %v540 = vpop.xlane.xlu0 %539
        %v541 = vmul.f32 %v532, 0.0078125
        %v542 = vmul.f32 %v534, 0.0078125
        %v543 = vmul.f32 %v538, 0.0078125
        %v544 = vmul.f32 %v540, 0.0078125
        %v545 = vmul.f32 %v541, %v541
        %v546 = vmul.f32 %v542, %v542
        %v547 = vsub.f32 %v543, %v545
        %v548 = vsub.f32 %v544, %v546
        %v549 = vmax.f32 %v547, 0.0
        %v550 = vmax.f32 %v548, 0.0
        %v551 = vsub.f32 %v523, %v541
        %v552 = vsub.f32 %v528, %v542
        %v553 = vadd.f32 %v549, 1e-05
        %v554 = vadd.f32 %v550, 1e-05
        %v555 = vrsqrt.pop %v553
        %v556 = vrsqrt.pop %v554
        %v557 = vmul.f32 %v551, %v555
        %v558 = vmul.f32 %v552, %v556
        %v559 = vld [vmem:[%s4] sm:$0x1]
        %v561 = vlaneseq
        %v562 = vshrl.u32 %v561, 7
        %v563 = vsub.s32 0, %v562
        %v564 = vrot.slane %v559, %v563
        %v566 = vmul.f32 %v557, %v564
        %v567 = vmul.f32 %v558, %v564
        %v568 = vld [vmem:[%s5] sm:$0x1]
        %v570 = vlaneseq
        %v571 = vshrl.u32 %v570, 7
        %v572 = vsub.s32 0, %v571
        %v573 = vrot.slane %v568, %v572
        %v575 = vadd.f32 %v566, %v573
        %v576 = vadd.f32 %v567, %v573
        %577 = vst [vmem:[%s341] sm:$0xff] %v575
        %578 = vst [vmem:[%s341 + $0x8] sm:$0xff] %v576
        %s579 = sand.u32 %s171, 1
        %s580 = scalar_lea.sflag [#allocation4], %s579
        %s581 = sand.u32 %s171, 1
        %s582 = smul.addr %s581, 16
        %s583 = scalar_lea.vmem [#allocation10], %s582
        // Predicated region
        $region61: #{tpu_custom_call.1} parent=43 // pred_check
          %p584 = pneg %p181
        $region62: #{tpu_custom_call.1} parent=43 // pred_check_branch
          %586 = sbr.rel (%p584) target = $region64
        $region63: #{tpu_custom_call.1} parent=43 // pred_region
          %s587 = smul.u32 2, %s27
          %s589 = ssub.s32 256, 256
          %590 = vsyncadd %s580, %s589
          %s591 = smul.addr %s587, 128
          %s592 = scalar_lea.hbm %s6, %s591
          %s593 = sshll.u32 %s583, 4
          %s594 = int_to_ptr.vmem [resolvable:$true] %s593
          %599 = dma.vmem_to_hbm [thread:$0]  %s594, 256, %s592, %s580, 128, 128, 8
        $region64: #{tpu_custom_call.1} parent=43 // pred_fallthru
          _
      $region44: #{tpu_custom_call.1} parent=5 // pred_fallthru
        _
      %p600 = scmp.le.s32.totalorder 2, %s22
      // Predicated region
      $region65: #{tpu_custom_call.1} parent=5 // pred_check
        %p601 = pneg %p600
      $region66: #{tpu_custom_call.1} parent=5 // pred_check_branch
        %603 = sbr.rel (%p601) target = $region68
      $region67: #{tpu_custom_call.1} parent=5 // pred_region
        %s604 = ssub.s32 %s22, 2
        // Predicated region
        $region69: #{tpu_custom_call.1} parent=67 // pred_check
          %p605 = pneg %p187
        $region70: #{tpu_custom_call.1} parent=67 // pred_check_branch
          %607 = sbr.rel (%p605) target = $region72
        $region71: #{tpu_custom_call.1} parent=67 // pred_region
          %s608 = sand.u32 %s172, 1
          %s609 = scalar_lea.sflag [#allocation4], %s608
          %s610 = sand.u32 %s172, 1
          %s611 = smul.addr %s610, 16
          %s612 = scalar_lea.vmem [#allocation10], %s611
          %613 = dma.done %s609, 256
        $region72: #{tpu_custom_call.1} parent=67 // pred_fallthru
          _
      $region68: #{tpu_custom_call.1} parent=5 // pred_fallthru
        _
    $region6: #{tpu_custom_call.1} parent=1 // loop_footer
      %s26 = sadd.s32 1, %s22
    $region7: #{tpu_custom_call.1} parent=1 // loop_footer_branch
      %21 = sbr.rel target = $region3
    $region8: #{tpu_custom_call.1} parent=1 // loop_exit
      _
    %614 = vsyncpa [#allocation3], 1
    %s615 = scalar_lea.sflag [#allocation3], 1
    %616 = vsyncpa %s615, 1
    %617 = vsyncpa [#allocation6], 1
    %s618 = scalar_lea.sflag [#allocation6], 1
    %619 = vsyncpa %s618, 1
    %620 = vsyncpa [#allocation9], 1
    %621 = vsyncpa [#allocation4], 1
    %s622 = scalar_lea.sflag [#allocation4], 1
    %623 = vsyncpa %s622, 1

</llo_original>
